<compile_context>
chip_gen: v7x
topology: tpu7x:2x2x1
jax: 0.10.0
libtpu: 0.0.40
codegen_flags: <defaults>
</compile_context>

<pallas_src>
import math
import jax
import jax.numpy as jnp
from jax.experimental import pallas as pl
from jax.experimental.pallas import tpu as pltpu

D_MODEL = 32
NUM_HEADS = 4
HEAD_DIM = D_MODEL // NUM_HEADS
SEQ_LEN = 16
BATCH = 2
POS_DIM = 3
EPS = 1e-5


def encoder_layer_kernel(src_ref, pos_ref,
                         wpT_ref, bp_ref,
                         wqkvT_ref, bqkv_ref,
                         woT_ref, bo_ref,
                         out_ref):
    # src_ref/out_ref: (B*L, E) batch-major slab; pos_ref: (B*L, 3).
    E, L, B, H, HD = D_MODEL, SEQ_LEN, BATCH, NUM_HEADS, HEAD_DIM

    x_src = src_ref[...]                                   # (B*L, E)
    pos = pos_ref[...]                                     # (B*L, 3)
    wpT = wpT_ref[...]                                     # (3, E)

    # self_posembed (pointwise Conv1d(3, E, 1)): three VPU broadcast multiply-adds.
    pos_emb = bp_ref[...]                                  # (1, E), broadcasts over rows
    for j in range(POS_DIM):
        pos_emb = pos_emb + pos[:, j:j + 1] * wpT[j:j + 1, :]

    # query = key = value = with_pos_embed(src, pos)
    x = x_src + pos_emb                                    # (B*L, E)

    # Fused Q/K/V in-projection on the whole slab (one MXU push).
    # 1/sqrt(head_dim) is pre-folded into the q columns of WqkvT / bqkv.
    qkv = jnp.dot(x, wqkvT_ref[...],
                  preferred_element_type=jnp.float32) + bqkv_ref[...]    # (B*L, 3E)
    q = qkv[:, :E]
    k = qkv[:, E:2 * E]
    v = qkv[:, 2 * E:]

    # Per-(batch, head) attention scores, staged into one (B*H*L, L) slab so the
    # softmax (max / exp / sum / reciprocal) runs once over all heads & batches.
    score_blocks = []
    for b in range(B):
        r0 = b * L
        for h in range(H):
            c0 = h * HD
            qh = q[r0:r0 + L, c0:c0 + HD]                  # (L, hd), already scaled
            kh = k[r0:r0 + L, c0:c0 + HD]
            # scores = qh @ kh^T without materializing kh.T
            score_blocks.append(
                jax.lax.dot_general(qh, kh, (((1,), (1,)), ((), ())),
                                    preferred_element_type=jnp.float32))  # (L, L)
    s_all = jnp.concatenate(score_blocks, axis=0)          # (B*H*L, L) = (128, 16)
    s_all = s_all - jnp.max(s_all, axis=-1, keepdims=True)  # stable softmax
    p_all = jnp.exp(s_all)
    denom = jnp.sum(p_all, axis=-1, keepdims=True)
    r = pl.reciprocal(denom, approx=True)                  # EUP slot
    r = r * (2.0 - denom * r)                              # one Newton step (~1e-7 rel err)
    p_all = p_all * r

    # p @ v per (batch, head), assembled into one (B*L, E) slab, then a single
    # (B*L, E) @ (E, E) out-projection.
    batch_rows = []
    for b in range(B):
        r0 = b * L
        head_cols = []
        for h in range(H):
            c0 = h * HD
            p0 = (b * H + h) * L
            ph = p_all[p0:p0 + L, :]                       # (L, L), sublane-aligned slice
            vh = v[r0:r0 + L, c0:c0 + HD]                  # (L, hd)
            head_cols.append(jnp.dot(ph, vh, preferred_element_type=jnp.float32))
        batch_rows.append(jnp.concatenate(head_cols, axis=1))   # (L, E)
    attn = jnp.concatenate(batch_rows, axis=0)             # (B*L, E)

    src2 = jnp.dot(attn, woT_ref[...],
                   preferred_element_type=jnp.float32) + bo_ref[...]     # (B*L, E)

    # Residual, per-batch InstanceNorm1d over the sequence axis, final ReLU.
    y = x_src + src2
    out_rows = []
    for b in range(B):
        r0 = b * L
        yb = y[r0:r0 + L, :]
        mean = jnp.mean(yb, axis=0, keepdims=True)
        var = jnp.mean((yb - mean) ** 2, axis=0, keepdims=True)
        yb = (yb - mean) * jax.lax.rsqrt(var + EPS)
        out_rows.append(jnp.maximum(yb, 0.0))
    out_ref[...] = jnp.concatenate(out_rows, axis=0)       # one lane-dense full store


@jax.jit
def transformer_encoder_layer(src_lbe, query_pos_b3l, params):
    """src_lbe: (L, B, E) float32, query_pos_b3l: (B, 3, L) float32 -> (L, B, E)."""
    WpT, bp, WqkvT, bqkv, WoT, bo = params
    L, B, E = src_lbe.shape

    # Layout plumbing (4 KB arrays, fused by XLA): batch-major contiguous slabs.
    src_slab = jnp.transpose(src_lbe, (1, 0, 2)).reshape(B * L, E)            # (B*L, E)
    pos_slab = jnp.transpose(query_pos_b3l, (0, 2, 1)).reshape(B * L, POS_DIM)  # (B*L, 3)

    def full(shape):
        return pl.BlockSpec(shape, lambda i: (0, 0))       # all operands are 2-D

    out = pl.pallas_call(
        encoder_layer_kernel,
        out_shape=jax.ShapeDtypeStruct((B * L, E), jnp.float32),
        grid=(1,),                                         # whole problem in one step
        in_specs=[
            full((B * L, E)),                              # src slab
            full((B * L, POS_DIM)),                        # query_pos slab
            full(WpT.shape), full(bp.shape),
            full(WqkvT.shape), full(bqkv.shape),
            full(WoT.shape), full(bo.shape),
        ],
        out_specs=full((B * L, E)),
        compiler_params=pltpu.CompilerParams(dimension_semantics=("arbitrary",)),
    )(src_slab, pos_slab, WpT, bp, WqkvT, bqkv, WoT, bo)

    return jnp.transpose(out.reshape(B, L, E), (1, 0, 2))  # back to (L, B, E)


def init_params(key):
    """Deterministic PyTorch-style (uniform +-1/sqrt(fan_in)) init.

    Q/K/V weights are pre-transposed and fused into one (E, 3E) matrix, with the
    1/sqrt(head_dim) attention scale folded into the q columns (weight AND bias).
    """
    ks = jax.random.split(key, 5)

    def lin(k, out_dim, in_dim):
        bound = 1.0 / math.sqrt(in_dim)
        kw, kb = jax.random.split(k)
        W = jax.random.uniform(kw, (out_dim, in_dim), jnp.float32, -bound, bound)
        b = jax.random.uniform(kb, (1, out_dim), jnp.float32, -bound, bound)
        return W, b

    Wp, bp = lin(ks[0], D_MODEL, POS_DIM)   # posembed pointwise conv
    Wq, bq = lin(ks[1], D_MODEL, D_MODEL)
    Wk, bk = lin(ks[2], D_MODEL, D_MODEL)
    Wv, bv = lin(ks[3], D_MODEL, D_MODEL)
    Wo, bo = lin(ks[4], D_MODEL, D_MODEL)

    scale = 1.0 / math.sqrt(HEAD_DIM)
    WqkvT = jnp.concatenate([Wq.T * scale, Wk.T, Wv.T], axis=1)   # (E, 3E)
    bqkv = jnp.concatenate([bq * scale, bk, bv], axis=1)          # (1, 3E)
    return (Wp.T, bp, WqkvT, bqkv, Wo.T, bo)


def reference(src_lbe, qpos_b3l, params):
    """Pure-JAX reference with identical semantics (scale already folded into q)."""
    WpT, bp, WqkvT, bqkv, WoT, bo = params
    L, B, E = src_lbe.shape
    src = jnp.transpose(src_lbe, (1, 0, 2))        # (B, L, E)
    pos_in = jnp.transpose(qpos_b3l, (0, 2, 1))    # (B, L, 3)
    x = src + (pos_in @ WpT + bp)
    qkv = x @ WqkvT + bqkv
    q, k, v = qkv[..., :E], qkv[..., E:2 * E], qkv[..., 2 * E:]
    qh = q.reshape(B, L, NUM_HEADS, HEAD_DIM).transpose(0, 2, 1, 3)
    kh = k.reshape(B, L, NUM_HEADS, HEAD_DIM).transpose(0, 2, 1, 3)
    vh = v.reshape(B, L, NUM_HEADS, HEAD_DIM).transpose(0, 2, 1, 3)
    s = qh @ kh.transpose(0, 1, 3, 2)              # 1/sqrt(hd) is folded into q
    p = jax.nn.softmax(s, axis=-1)
    o = (p @ vh).transpose(0, 2, 1, 3).reshape(B, L, E)
    y = src + (o @ WoT + bo)
    mean = y.mean(axis=1, keepdims=True)
    var = ((y - mean) ** 2).mean(axis=1, keepdims=True)
    y = jnp.maximum((y - mean) / jnp.sqrt(var + EPS), 0.0)
    return jnp.transpose(y, (1, 0, 2))


if __name__ == "__main__":
    key = jax.random.PRNGKey(0)
    kp, ksrc, kpos = jax.random.split(key, 3)
    params = init_params(kp)
    src = jax.random.normal(ksrc, (SEQ_LEN, BATCH, D_MODEL), jnp.float32)        # (L, B, E)
    query_pos = jax.random.normal(kpos, (BATCH, POS_DIM, SEQ_LEN), jnp.float32)  # (B, 3, L)

    out = transformer_encoder_layer(src, query_pos, params)
    out = jax.block_until_ready(out)

    ref = reference(src, query_pos, params)
    assert out.shape == (SEQ_LEN, BATCH, D_MODEL)
    err = float(jnp.max(jnp.abs(out - ref)))
    assert jnp.allclose(out, ref, atol=1e-4, rtol=1e-4), err
    print("KERNEL_OK")
</pallas_src>

<mosaic_0001>
module attributes {stable_mosaic.version = 11 : i64} {
  func.func @encoder_layer_kernel(%arg0: i32, %arg1: memref<32x32xf32, #tpu.memory_space<vmem>>, %arg2: memref<32x3xf32, #tpu.memory_space<vmem>>, %arg3: memref<3x32xf32, #tpu.memory_space<vmem>>, %arg4: memref<1x32xf32, #tpu.memory_space<vmem>>, %arg5: memref<32x96xf32, #tpu.memory_space<vmem>>, %arg6: memref<1x96xf32, #tpu.memory_space<vmem>>, %arg7: memref<32x32xf32, #tpu.memory_space<vmem>>, %arg8: memref<1x32xf32, #tpu.memory_space<vmem>>, %arg9: memref<32x32xf32, #tpu.memory_space<vmem>>) attributes {dimension_semantics = [#tpu.dimension_semantics<arbitrary>], iteration_bounds = array<i64: 1>, scalar_prefetch = 0 : i64, scratch_operands = 0 : i64, tpu.core_type = #tpu.core_type<tc>, window_params = [{pipeline_mode = #tpu.pipeline_mode<synchronous>, transform_indices = @transform_0, window_bounds = array<i64: 32, 32>}, {pipeline_mode = #tpu.pipeline_mode<synchronous>, transform_indices = @transform_1, window_bounds = array<i64: 32, 3>}, {pipeline_mode = #tpu.pipeline_mode<synchronous>, transform_indices = @transform_2, window_bounds = array<i64: 3, 32>}, {pipeline_mode = #tpu.pipeline_mode<synchronous>, transform_indices = @transform_3, window_bounds = array<i64: 1, 32>}, {pipeline_mode = #tpu.pipeline_mode<synchronous>, transform_indices = @transform_4, window_bounds = array<i64: 32, 96>}, {pipeline_mode = #tpu.pipeline_mode<synchronous>, transform_indices = @transform_5, window_bounds = array<i64: 1, 96>}, {pipeline_mode = #tpu.pipeline_mode<synchronous>, transform_indices = @transform_6, window_bounds = array<i64: 32, 32>}, {pipeline_mode = #tpu.pipeline_mode<synchronous>, transform_indices = @transform_7, window_bounds = array<i64: 1, 32>}, {pipeline_mode = #tpu.pipeline_mode<synchronous>, transform_indices = @transform_8, window_bounds = array<i64: 32, 32>}]} {
    %c0 = arith.constant 0 : index
    %c0_0 = arith.constant 0 : index
    %0 = vector.load %arg1[%c0, %c0_0] : memref<32x32xf32, #tpu.memory_space<vmem>>, vector<32x32xf32>
    %c0_1 = arith.constant 0 : index
    %c0_2 = arith.constant 0 : index
    %1 = vector.load %arg2[%c0_1, %c0_2] : memref<32x3xf32, #tpu.memory_space<vmem>>, vector<32x3xf32>
    %c0_3 = arith.constant 0 : index
    %c0_4 = arith.constant 0 : index
    %2 = vector.load %arg3[%c0_3, %c0_4] : memref<3x32xf32, #tpu.memory_space<vmem>>, vector<3x32xf32>
    %c0_5 = arith.constant 0 : index
    %c0_6 = arith.constant 0 : index
    %3 = vector.load %arg4[%c0_5, %c0_6] : memref<1x32xf32, #tpu.memory_space<vmem>>, vector<1x32xf32>
    %4 = vector.extract_strided_slice %1 {offsets = [0, 0], sizes = [32, 1], strides = [1, 1]} : vector<32x3xf32> to vector<32x1xf32>
    %5 = vector.extract_strided_slice %2 {offsets = [0, 0], sizes = [1, 32], strides = [1, 1]} : vector<3x32xf32> to vector<1x32xf32>
    %6 = vector.broadcast %4 : vector<32x1xf32> to vector<32x32xf32>
    %7 = vector.broadcast %5 : vector<1x32xf32> to vector<32x32xf32>
    %8 = arith.mulf %6, %7 : vector<32x32xf32>
    %9 = vector.broadcast %3 : vector<1x32xf32> to vector<32x32xf32>
    %10 = arith.addf %9, %8 : vector<32x32xf32>
    %11 = vector.extract_strided_slice %1 {offsets = [0, 1], sizes = [32, 1], strides = [1, 1]} : vector<32x3xf32> to vector<32x1xf32>
    %12 = vector.extract_strided_slice %2 {offsets = [1, 0], sizes = [1, 32], strides = [1, 1]} : vector<3x32xf32> to vector<1x32xf32>
    %13 = vector.broadcast %11 : vector<32x1xf32> to vector<32x32xf32>
    %14 = vector.broadcast %12 : vector<1x32xf32> to vector<32x32xf32>
    %15 = arith.mulf %13, %14 : vector<32x32xf32>
    %16 = arith.addf %10, %15 : vector<32x32xf32>
    %17 = vector.extract_strided_slice %1 {offsets = [0, 2], sizes = [32, 1], strides = [1, 1]} : vector<32x3xf32> to vector<32x1xf32>
    %18 = vector.extract_strided_slice %2 {offsets = [2, 0], sizes = [1, 32], strides = [1, 1]} : vector<3x32xf32> to vector<1x32xf32>
    %19 = vector.broadcast %17 : vector<32x1xf32> to vector<32x32xf32>
    %20 = vector.broadcast %18 : vector<1x32xf32> to vector<32x32xf32>
    %21 = arith.mulf %19, %20 : vector<32x32xf32>
    %22 = arith.addf %16, %21 : vector<32x32xf32>
    %23 = arith.addf %0, %22 : vector<32x32xf32>
    %c0_7 = arith.constant 0 : index
    %c0_8 = arith.constant 0 : index
    %24 = vector.load %arg5[%c0_7, %c0_8] : memref<32x96xf32, #tpu.memory_space<vmem>>, vector<32x96xf32>
    %cst = arith.constant dense<0.000000e+00> : vector<32x96xf32>
    %25 = tpu.matmul %23, %24, %cst {dimension_numbers = #tpu.dot_dimension_numbers<[1], [0], [0], [1], [0, 0, 1, 1], [], []>} : vector<32x32xf32>, vector<32x96xf32>, vector<32x96xf32> -> vector<32x96xf32>
    %c0_9 = arith.constant 0 : index
    %c0_10 = arith.constant 0 : index
    %26 = vector.load %arg6[%c0_9, %c0_10] : memref<1x96xf32, #tpu.memory_space<vmem>>, vector<1x96xf32>
    %27 = vector.broadcast %26 : vector<1x96xf32> to vector<32x96xf32>
    %28 = arith.addf %25, %27 : vector<32x96xf32>
    %29 = vector.extract_strided_slice %28 {offsets = [0, 0], sizes = [32, 32], strides = [1, 1]} : vector<32x96xf32> to vector<32x32xf32>
    %30 = vector.extract_strided_slice %28 {offsets = [0, 32], sizes = [32, 32], strides = [1, 1]} : vector<32x96xf32> to vector<32x32xf32>
    %31 = vector.extract_strided_slice %28 {offsets = [0, 64], sizes = [32, 32], strides = [1, 1]} : vector<32x96xf32> to vector<32x32xf32>
    %32 = vector.extract_strided_slice %29 {offsets = [0, 0], sizes = [16, 8], strides = [1, 1]} : vector<32x32xf32> to vector<16x8xf32>
    %33 = vector.extract_strided_slice %30 {offsets = [0, 0], sizes = [16, 8], strides = [1, 1]} : vector<32x32xf32> to vector<16x8xf32>
    %cst_11 = arith.constant dense<0.000000e+00> : vector<16x16xf32>
    %34 = tpu.matmul %32, %33, %cst_11 {dimension_numbers = #tpu.dot_dimension_numbers<[1], [1], [0], [0], [0, 0, 1, 0], [], []>} : vector<16x8xf32>, vector<16x8xf32>, vector<16x16xf32> -> vector<16x16xf32>
    %35 = vector.extract_strided_slice %29 {offsets = [0, 8], sizes = [16, 8], strides = [1, 1]} : vector<32x32xf32> to vector<16x8xf32>
    %36 = vector.extract_strided_slice %30 {offsets = [0, 8], sizes = [16, 8], strides = [1, 1]} : vector<32x32xf32> to vector<16x8xf32>
    %cst_12 = arith.constant dense<0.000000e+00> : vector<16x16xf32>
    %37 = tpu.matmul %35, %36, %cst_12 {dimension_numbers = #tpu.dot_dimension_numbers<[1], [1], [0], [0], [0, 0, 1, 0], [], []>} : vector<16x8xf32>, vector<16x8xf32>, vector<16x16xf32> -> vector<16x16xf32>
    %38 = vector.extract_strided_slice %29 {offsets = [0, 16], sizes = [16, 8], strides = [1, 1]} : vector<32x32xf32> to vector<16x8xf32>
    %39 = vector.extract_strided_slice %30 {offsets = [0, 16], sizes = [16, 8], strides = [1, 1]} : vector<32x32xf32> to vector<16x8xf32>
    %cst_13 = arith.constant dense<0.000000e+00> : vector<16x16xf32>
    %40 = tpu.matmul %38, %39, %cst_13 {dimension_numbers = #tpu.dot_dimension_numbers<[1], [1], [0], [0], [0, 0, 1, 0], [], []>} : vector<16x8xf32>, vector<16x8xf32>, vector<16x16xf32> -> vector<16x16xf32>
    %41 = vector.extract_strided_slice %29 {offsets = [0, 24], sizes = [16, 8], strides = [1, 1]} : vector<32x32xf32> to vector<16x8xf32>
    %42 = vector.extract_strided_slice %30 {offsets = [0, 24], sizes = [16, 8], strides = [1, 1]} : vector<32x32xf32> to vector<16x8xf32>
    %cst_14 = arith.constant dense<0.000000e+00> : vector<16x16xf32>
    %43 = tpu.matmul %41, %42, %cst_14 {dimension_numbers = #tpu.dot_dimension_numbers<[1], [1], [0], [0], [0, 0, 1, 0], [], []>} : vector<16x8xf32>, vector<16x8xf32>, vector<16x16xf32> -> vector<16x16xf32>
    %44 = vector.extract_strided_slice %29 {offsets = [16, 0], sizes = [16, 8], strides = [1, 1]} : vector<32x32xf32> to vector<16x8xf32>
    %45 = vector.extract_strided_slice %30 {offsets = [16, 0], sizes = [16, 8], strides = [1, 1]} : vector<32x32xf32> to vector<16x8xf32>
    %cst_15 = arith.constant dense<0.000000e+00> : vector<16x16xf32>
    %46 = tpu.matmul %44, %45, %cst_15 {dimension_numbers = #tpu.dot_dimension_numbers<[1], [1], [0], [0], [0, 0, 1, 0], [], []>} : vector<16x8xf32>, vector<16x8xf32>, vector<16x16xf32> -> vector<16x16xf32>
    %47 = vector.extract_strided_slice %29 {offsets = [16, 8], sizes = [16, 8], strides = [1, 1]} : vector<32x32xf32> to vector<16x8xf32>
    %48 = vector.extract_strided_slice %30 {offsets = [16, 8], sizes = [16, 8], strides = [1, 1]} : vector<32x32xf32> to vector<16x8xf32>
    %cst_16 = arith.constant dense<0.000000e+00> : vector<16x16xf32>
    %49 = tpu.matmul %47, %48, %cst_16 {dimension_numbers = #tpu.dot_dimension_numbers<[1], [1], [0], [0], [0, 0, 1, 0], [], []>} : vector<16x8xf32>, vector<16x8xf32>, vector<16x16xf32> -> vector<16x16xf32>
    %50 = vector.extract_strided_slice %29 {offsets = [16, 16], sizes = [16, 8], strides = [1, 1]} : vector<32x32xf32> to vector<16x8xf32>
    %51 = vector.extract_strided_slice %30 {offsets = [16, 16], sizes = [16, 8], strides = [1, 1]} : vector<32x32xf32> to vector<16x8xf32>
    %cst_17 = arith.constant dense<0.000000e+00> : vector<16x16xf32>
    %52 = tpu.matmul %50, %51, %cst_17 {dimension_numbers = #tpu.dot_dimension_numbers<[1], [1], [0], [0], [0, 0, 1, 0], [], []>} : vector<16x8xf32>, vector<16x8xf32>, vector<16x16xf32> -> vector<16x16xf32>
    %53 = vector.extract_strided_slice %29 {offsets = [16, 24], sizes = [16, 8], strides = [1, 1]} : vector<32x32xf32> to vector<16x8xf32>
    %54 = vector.extract_strided_slice %30 {offsets = [16, 24], sizes = [16, 8], strides = [1, 1]} : vector<32x32xf32> to vector<16x8xf32>
    %cst_18 = arith.constant dense<0.000000e+00> : vector<16x16xf32>
    %55 = tpu.matmul %53, %54, %cst_18 {dimension_numbers = #tpu.dot_dimension_numbers<[1], [1], [0], [0], [0, 0, 1, 0], [], []>} : vector<16x8xf32>, vector<16x8xf32>, vector<16x16xf32> -> vector<16x16xf32>
    %56 = tpu.concatenate %34, %37, %40, %43, %46, %49, %52, %55 in 0 : vector<16x16xf32>, vector<16x16xf32>, vector<16x16xf32>, vector<16x16xf32>, vector<16x16xf32>, vector<16x16xf32>, vector<16x16xf32>, vector<16x16xf32> -> vector<128x16xf32>
    %cst_19 = arith.constant dense<0xFF800000> : vector<128xf32>
    %57 = vector.multi_reduction <maximumf>, %56, %cst_19 [1] : vector<128x16xf32> to vector<128xf32>
    %58 = vector.shape_cast %57 : vector<128xf32> to vector<128x1xf32>
    %59 = vector.broadcast %58 : vector<128x1xf32> to vector<128x16xf32>
    %60 = arith.subf %56, %59 : vector<128x16xf32>
    %61 = math.exp %60 : vector<128x16xf32>
    %cst_20 = arith.constant dense<0.000000e+00> : vector<128xf32>
    %62 = vector.multi_reduction <add>, %61, %cst_20 [1] : vector<128x16xf32> to vector<128xf32>
    %63 = vector.shape_cast %62 : vector<128xf32> to vector<128x1xf32>
    %64 = tpu.reciprocal %63 {approx = true} : vector<128x1xf32> -> vector<128x1xf32>
    %65 = arith.mulf %63, %64 : vector<128x1xf32>
    %cst_21 = arith.constant 2.000000e+00 : f32
    %66 = vector.broadcast %cst_21 : f32 to vector<128x1xf32>
    %67 = arith.subf %66, %65 : vector<128x1xf32>
    %68 = arith.mulf %64, %67 : vector<128x1xf32>
    %69 = vector.broadcast %68 : vector<128x1xf32> to vector<128x16xf32>
    %70 = arith.mulf %61, %69 : vector<128x16xf32>
    %71 = vector.extract_strided_slice %70 {offsets = [0, 0], sizes = [16, 16], strides = [1, 1]} : vector<128x16xf32> to vector<16x16xf32>
    %72 = vector.extract_strided_slice %31 {offsets = [0, 0], sizes = [16, 8], strides = [1, 1]} : vector<32x32xf32> to vector<16x8xf32>
    %cst_22 = arith.constant dense<0.000000e+00> : vector<16x8xf32>
    %73 = tpu.matmul %71, %72, %cst_22 {dimension_numbers = #tpu.dot_dimension_numbers<[1], [0], [0], [1], [0, 0, 1, 1], [], []>} : vector<16x16xf32>, vector<16x8xf32>, vector<16x8xf32> -> vector<16x8xf32>
    %74 = vector.extract_strided_slice %70 {offsets = [16, 0], sizes = [16, 16], strides = [1, 1]} : vector<128x16xf32> to vector<16x16xf32>
    %75 = vector.extract_strided_slice %31 {offsets = [0, 8], sizes = [16, 8], strides = [1, 1]} : vector<32x32xf32> to vector<16x8xf32>
    %cst_23 = arith.constant dense<0.000000e+00> : vector<16x8xf32>
    %76 = tpu.matmul %74, %75, %cst_23 {dimension_numbers = #tpu.dot_dimension_numbers<[1], [0], [0], [1], [0, 0, 1, 1], [], []>} : vector<16x16xf32>, vector<16x8xf32>, vector<16x8xf32> -> vector<16x8xf32>
    %77 = vector.extract_strided_slice %70 {offsets = [32, 0], sizes = [16, 16], strides = [1, 1]} : vector<128x16xf32> to vector<16x16xf32>
    %78 = vector.extract_strided_slice %31 {offsets = [0, 16], sizes = [16, 8], strides = [1, 1]} : vector<32x32xf32> to vector<16x8xf32>
    %cst_24 = arith.constant dense<0.000000e+00> : vector<16x8xf32>
    %79 = tpu.matmul %77, %78, %cst_24 {dimension_numbers = #tpu.dot_dimension_numbers<[1], [0], [0], [1], [0, 0, 1, 1], [], []>} : vector<16x16xf32>, vector<16x8xf32>, vector<16x8xf32> -> vector<16x8xf32>
    %80 = vector.extract_strided_slice %70 {offsets = [48, 0], sizes = [16, 16], strides = [1, 1]} : vector<128x16xf32> to vector<16x16xf32>
    %81 = vector.extract_strided_slice %31 {offsets = [0, 24], sizes = [16, 8], strides = [1, 1]} : vector<32x32xf32> to vector<16x8xf32>
    %cst_25 = arith.constant dense<0.000000e+00> : vector<16x8xf32>
    %82 = tpu.matmul %80, %81, %cst_25 {dimension_numbers = #tpu.dot_dimension_numbers<[1], [0], [0], [1], [0, 0, 1, 1], [], []>} : vector<16x16xf32>, vector<16x8xf32>, vector<16x8xf32> -> vector<16x8xf32>
    %83 = tpu.concatenate %73, %76, %79, %82 in 1 : vector<16x8xf32>, vector<16x8xf32>, vector<16x8xf32>, vector<16x8xf32> -> vector<16x32xf32>
    %84 = vector.extract_strided_slice %70 {offsets = [64, 0], sizes = [16, 16], strides = [1, 1]} : vector<128x16xf32> to vector<16x16xf32>
    %85 = vector.extract_strided_slice %31 {offsets = [16, 0], sizes = [16, 8], strides = [1, 1]} : vector<32x32xf32> to vector<16x8xf32>
    %cst_26 = arith.constant dense<0.000000e+00> : vector<16x8xf32>
    %86 = tpu.matmul %84, %85, %cst_26 {dimension_numbers = #tpu.dot_dimension_numbers<[1], [0], [0], [1], [0, 0, 1, 1], [], []>} : vector<16x16xf32>, vector<16x8xf32>, vector<16x8xf32> -> vector<16x8xf32>
    %87 = vector.extract_strided_slice %70 {offsets = [80, 0], sizes = [16, 16], strides = [1, 1]} : vector<128x16xf32> to vector<16x16xf32>
    %88 = vector.extract_strided_slice %31 {offsets = [16, 8], sizes = [16, 8], strides = [1, 1]} : vector<32x32xf32> to vector<16x8xf32>
    %cst_27 = arith.constant dense<0.000000e+00> : vector<16x8xf32>
    %89 = tpu.matmul %87, %88, %cst_27 {dimension_numbers = #tpu.dot_dimension_numbers<[1], [0], [0], [1], [0, 0, 1, 1], [], []>} : vector<16x16xf32>, vector<16x8xf32>, vector<16x8xf32> -> vector<16x8xf32>
    %90 = vector.extract_strided_slice %70 {offsets = [96, 0], sizes = [16, 16], strides = [1, 1]} : vector<128x16xf32> to vector<16x16xf32>
    %91 = vector.extract_strided_slice %31 {offsets = [16, 16], sizes = [16, 8], strides = [1, 1]} : vector<32x32xf32> to vector<16x8xf32>
    %cst_28 = arith.constant dense<0.000000e+00> : vector<16x8xf32>
    %92 = tpu.matmul %90, %91, %cst_28 {dimension_numbers = #tpu.dot_dimension_numbers<[1], [0], [0], [1], [0, 0, 1, 1], [], []>} : vector<16x16xf32>, vector<16x8xf32>, vector<16x8xf32> -> vector<16x8xf32>
    %93 = vector.extract_strided_slice %70 {offsets = [112, 0], sizes = [16, 16], strides = [1, 1]} : vector<128x16xf32> to vector<16x16xf32>
    %94 = vector.extract_strided_slice %31 {offsets = [16, 24], sizes = [16, 8], strides = [1, 1]} : vector<32x32xf32> to vector<16x8xf32>
    %cst_29 = arith.constant dense<0.000000e+00> : vector<16x8xf32>
    %95 = tpu.matmul %93, %94, %cst_29 {dimension_numbers = #tpu.dot_dimension_numbers<[1], [0], [0], [1], [0, 0, 1, 1], [], []>} : vector<16x16xf32>, vector<16x8xf32>, vector<16x8xf32> -> vector<16x8xf32>
    %96 = tpu.concatenate %86, %89, %92, %95 in 1 : vector<16x8xf32>, vector<16x8xf32>, vector<16x8xf32>, vector<16x8xf32> -> vector<16x32xf32>
    %97 = tpu.concatenate %83, %96 in 0 : vector<16x32xf32>, vector<16x32xf32> -> vector<32x32xf32>
    %c0_30 = arith.constant 0 : index
    %c0_31 = arith.constant 0 : index
    %98 = vector.load %arg7[%c0_30, %c0_31] : memref<32x32xf32, #tpu.memory_space<vmem>>, vector<32x32xf32>
    %cst_32 = arith.constant dense<0.000000e+00> : vector<32x32xf32>
    %99 = tpu.matmul %97, %98, %cst_32 {dimension_numbers = #tpu.dot_dimension_numbers<[1], [0], [0], [1], [0, 0, 1, 1], [], []>} : vector<32x32xf32>, vector<32x32xf32>, vector<32x32xf32> -> vector<32x32xf32>
    %c0_33 = arith.constant 0 : index
    %c0_34 = arith.constant 0 : index
    %100 = vector.load %arg8[%c0_33, %c0_34] : memref<1x32xf32, #tpu.memory_space<vmem>>, vector<1x32xf32>
    %101 = vector.broadcast %100 : vector<1x32xf32> to vector<32x32xf32>
    %102 = arith.addf %99, %101 : vector<32x32xf32>
    %103 = arith.addf %0, %102 : vector<32x32xf32>
    %104 = vector.extract_strided_slice %103 {offsets = [0, 0], sizes = [16, 32], strides = [1, 1]} : vector<32x32xf32> to vector<16x32xf32>
    %cst_35 = arith.constant dense<0.000000e+00> : vector<32xf32>
    %105 = vector.multi_reduction <add>, %104, %cst_35 [0] : vector<16x32xf32> to vector<32xf32>
    %106 = vector.shape_cast %105 : vector<32xf32> to vector<1x32xf32>
    %cst_36 = arith.constant 1.600000e+01 : f32
    %107 = vector.broadcast %cst_36 : f32 to vector<1x32xf32>
    %108 = arith.divf %106, %107 : vector<1x32xf32>
    %109 = vector.broadcast %108 : vector<1x32xf32> to vector<16x32xf32>
    %110 = arith.subf %104, %109 : vector<16x32xf32>
    %111 = arith.mulf %110, %110 : vector<16x32xf32>
    %cst_37 = arith.constant dense<0.000000e+00> : vector<32xf32>
    %112 = vector.multi_reduction <add>, %111, %cst_37 [0] : vector<16x32xf32> to vector<32xf32>
    %113 = vector.shape_cast %112 : vector<32xf32> to vector<1x32xf32>
    %cst_38 = arith.constant 1.600000e+01 : f32
    %114 = vector.broadcast %cst_38 : f32 to vector<1x32xf32>
    %115 = arith.divf %113, %114 : vector<1x32xf32>
    %116 = vector.broadcast %108 : vector<1x32xf32> to vector<16x32xf32>
    %117 = arith.subf %104, %116 : vector<16x32xf32>
    %cst_39 = arith.constant 9.99999974E-6 : f32
    %118 = vector.broadcast %cst_39 : f32 to vector<1x32xf32>
    %119 = arith.addf %115, %118 : vector<1x32xf32>
    %120 = math.rsqrt %119 : vector<1x32xf32>
    %121 = vector.broadcast %120 : vector<1x32xf32> to vector<16x32xf32>
    %122 = arith.mulf %117, %121 : vector<16x32xf32>
    %cst_40 = arith.constant 0.000000e+00 : f32
    %123 = vector.broadcast %cst_40 : f32 to vector<16x32xf32>
    %124 = arith.maximumf %122, %123 : vector<16x32xf32>
    %125 = vector.extract_strided_slice %103 {offsets = [16, 0], sizes = [16, 32], strides = [1, 1]} : vector<32x32xf32> to vector<16x32xf32>
    %cst_41 = arith.constant dense<0.000000e+00> : vector<32xf32>
    %126 = vector.multi_reduction <add>, %125, %cst_41 [0] : vector<16x32xf32> to vector<32xf32>
    %127 = vector.shape_cast %126 : vector<32xf32> to vector<1x32xf32>
    %cst_42 = arith.constant 1.600000e+01 : f32
    %128 = vector.broadcast %cst_42 : f32 to vector<1x32xf32>
    %129 = arith.divf %127, %128 : vector<1x32xf32>
    %130 = vector.broadcast %129 : vector<1x32xf32> to vector<16x32xf32>
    %131 = arith.subf %125, %130 : vector<16x32xf32>
    %132 = arith.mulf %131, %131 : vector<16x32xf32>
    %cst_43 = arith.constant dense<0.000000e+00> : vector<32xf32>
    %133 = vector.multi_reduction <add>, %132, %cst_43 [0] : vector<16x32xf32> to vector<32xf32>
    %134 = vector.shape_cast %133 : vector<32xf32> to vector<1x32xf32>
    %cst_44 = arith.constant 1.600000e+01 : f32
    %135 = vector.broadcast %cst_44 : f32 to vector<1x32xf32>
    %136 = arith.divf %134, %135 : vector<1x32xf32>
    %137 = vector.broadcast %129 : vector<1x32xf32> to vector<16x32xf32>
    %138 = arith.subf %125, %137 : vector<16x32xf32>
    %cst_45 = arith.constant 9.99999974E-6 : f32
    %139 = vector.broadcast %cst_45 : f32 to vector<1x32xf32>
    %140 = arith.addf %136, %139 : vector<1x32xf32>
    %141 = math.rsqrt %140 : vector<1x32xf32>
    %142 = vector.broadcast %141 : vector<1x32xf32> to vector<16x32xf32>
    %143 = arith.mulf %138, %142 : vector<16x32xf32>
    %cst_46 = arith.constant 0.000000e+00 : f32
    %144 = vector.broadcast %cst_46 : f32 to vector<16x32xf32>
    %145 = arith.maximumf %143, %144 : vector<16x32xf32>
    %146 = tpu.concatenate %124, %145 in 0 : vector<16x32xf32>, vector<16x32xf32> -> vector<32x32xf32>
    %c0_47 = arith.constant 0 : index
    %c0_48 = arith.constant 0 : index
    %147 = vector.load %arg9[%c0_47, %c0_48] : memref<32x32xf32, #tpu.memory_space<vmem>>, vector<32x32xf32>
    tpu.vector_store %arg9[%c0_47, %c0_48], %146 {strides = array<i32>} : memref<32x32xf32, #tpu.memory_space<vmem>>, vector<32x32xf32>,
    return
  }
  func.func @transform_0(%arg0: i32) -> (i32, i32) {
    %c0_i32 = arith.constant 0 : i32
    %c0_i32_0 = arith.constant 0 : i32
    %c0_i32_1 = arith.constant 0 : i32
    return %c0_i32, %c0_i32_0 : i32, i32
  }
  func.func @transform_1(%arg0: i32) -> (i32, i32) {
    %c0_i32 = arith.constant 0 : i32
    %c0_i32_0 = arith.constant 0 : i32
    %c0_i32_1 = arith.constant 0 : i32
    return %c0_i32, %c0_i32_0 : i32, i32
  }
  func.func @transform_2(%arg0: i32) -> (i32, i32) {
    %c0_i32 = arith.constant 0 : i32
    %c0_i32_0 = arith.constant 0 : i32
    %c0_i32_1 = arith.constant 0 : i32
    return %c0_i32, %c0_i32_0 : i32, i32
  }
  func.func @transform_3(%arg0: i32) -> (i32, i32) {
    %c0_i32 = arith.constant 0 : i32
    %c0_i32_0 = arith.constant 0 : i32
    %c0_i32_1 = arith.constant 0 : i32
    return %c0_i32, %c0_i32_0 : i32, i32
  }
  func.func @transform_4(%arg0: i32) -> (i32, i32) {
    %c0_i32 = arith.constant 0 : i32
    %c0_i32_0 = arith.constant 0 : i32
    %c0_i32_1 = arith.constant 0 : i32
    return %c0_i32, %c0_i32_0 : i32, i32
  }
  func.func @transform_5(%arg0: i32) -> (i32, i32) {
    %c0_i32 = arith.constant 0 : i32
    %c0_i32_0 = arith.constant 0 : i32
    %c0_i32_1 = arith.constant 0 : i32
    return %c0_i32, %c0_i32_0 : i32, i32
  }
  func.func @transform_6(%arg0: i32) -> (i32, i32) {
    %c0_i32 = arith.constant 0 : i32
    %c0_i32_0 = arith.constant 0 : i32
    %c0_i32_1 = arith.constant 0 : i32
    return %c0_i32, %c0_i32_0 : i32, i32
  }
  func.func @transform_7(%arg0: i32) -> (i32, i32) {
    %c0_i32 = arith.constant 0 : i32
    %c0_i32_0 = arith.constant 0 : i32
    %c0_i32_1 = arith.constant 0 : i32
    return %c0_i32, %c0_i32_0 : i32, i32
  }
  func.func @transform_8(%arg0: i32) -> (i32, i32) {
    %c0_i32 = arith.constant 0 : i32
    %c0_i32_0 = arith.constant 0 : i32
    %c0_i32_1 = arith.constant 0 : i32
    return %c0_i32, %c0_i32_0 : i32, i32
  }
}

</mosaic_0001>

<llo_original>
// kernel: transformer_encoder_layer.1
$region0: #{transformer_encoder_layer.1}
  #allocation0 [shape = 'u32[]', space=smem, size = 0x4, offset = 0x4, fixed_abs, tag = 'smem constant byte address 0x4 - core index']
  #allocation1 [shape = 'u32[144,128]{1,0:T(1,128)}', space=vmem, size = 0x12000, scoped, tag = 'internal scratch']
  %s0 = inlined_call_operand.vmem [shape: f32[32,32], index: 0, kind: input, shape index: {}]
  %s1 = inlined_call_operand.vmem [shape: f32[32,3], index: 1, kind: input, shape index: {}]
  %s2 = inlined_call_operand.vmem [shape: f32[3,32], index: 2, kind: input, shape index: {}]
  %s3 = inlined_call_operand.vmem [shape: f32[1,32], index: 3, kind: input, shape index: {}]
  %s4 = inlined_call_operand.vmem [shape: f32[32,96], index: 4, kind: input, shape index: {}]
  %s5 = inlined_call_operand.vmem [shape: f32[1,96], index: 5, kind: input, shape index: {}]
  %s6 = inlined_call_operand.vmem [shape: f32[32,32], index: 6, kind: input, shape index: {}]
  %s7 = inlined_call_operand.vmem [shape: f32[1,32], index: 7, kind: input, shape index: {}]
  %s8 = inlined_call_operand.vmem [shape: f32[32,32], index: 8, kind: output, shape index: {}]
  %s9 = sld [smem:[#allocation0]]
  $region42: #{transformer_encoder_layer.1} parent=0
    _
  %s11 = ssub.s32 1, %s9
  %s12 = scalar_select 0, %s11, %s9
  // Predicated region
  $region2: #{transformer_encoder_layer.1} parent=0 // pred_check
    _
  $region3: #{transformer_encoder_layer.1} parent=0 // pred_check_branch
    %14 = sbr.rel (0) target = $region5
  $region4: #{transformer_encoder_layer.1} parent=0 // pred_region
    _
  $region5: #{transformer_encoder_layer.1} parent=0 // pred_fallthru
    _
  // Predicated region
  $region6: #{transformer_encoder_layer.1} parent=0 // pred_check
    _
  $region7: #{transformer_encoder_layer.1} parent=0 // pred_check_branch
    %16 = sbr.rel (0) target = $region9
  $region8: #{transformer_encoder_layer.1} parent=0 // pred_region
    _
  $region9: #{transformer_encoder_layer.1} parent=0 // pred_fallthru
    _
  // Predicated region
  $region10: #{transformer_encoder_layer.1} parent=0 // pred_check
    _
  $region11: #{transformer_encoder_layer.1} parent=0 // pred_check_branch
    %18 = sbr.rel (0) target = $region13
  $region12: #{transformer_encoder_layer.1} parent=0 // pred_region
    _
  $region13: #{transformer_encoder_layer.1} parent=0 // pred_fallthru
    _
  // Predicated region
  $region14: #{transformer_encoder_layer.1} parent=0 // pred_check
    _
  $region15: #{transformer_encoder_layer.1} parent=0 // pred_check_branch
    %20 = sbr.rel (0) target = $region17
  $region16: #{transformer_encoder_layer.1} parent=0 // pred_region
    _
  $region17: #{transformer_encoder_layer.1} parent=0 // pred_fallthru
    _
  // Predicated region
  $region18: #{transformer_encoder_layer.1} parent=0 // pred_check
    _
  $region19: #{transformer_encoder_layer.1} parent=0 // pred_check_branch
    %22 = sbr.rel (0) target = $region21
  $region20: #{transformer_encoder_layer.1} parent=0 // pred_region
    _
  $region21: #{transformer_encoder_layer.1} parent=0 // pred_fallthru
    _
  // Predicated region
  $region22: #{transformer_encoder_layer.1} parent=0 // pred_check
    _
  $region23: #{transformer_encoder_layer.1} parent=0 // pred_check_branch
    %24 = sbr.rel (0) target = $region25
  $region24: #{transformer_encoder_layer.1} parent=0 // pred_region
    _
  $region25: #{transformer_encoder_layer.1} parent=0 // pred_fallthru
    _
  // Predicated region
  $region26: #{transformer_encoder_layer.1} parent=0 // pred_check
    _
  $region27: #{transformer_encoder_layer.1} parent=0 // pred_check_branch
    %26 = sbr.rel (0) target = $region29
  $region28: #{transformer_encoder_layer.1} parent=0 // pred_region
    _
  $region29: #{transformer_encoder_layer.1} parent=0 // pred_fallthru
    _
  // Predicated region
  $region30: #{transformer_encoder_layer.1} parent=0 // pred_check
    _
  $region31: #{transformer_encoder_layer.1} parent=0 // pred_check_branch
    %28 = sbr.rel (0) target = $region33
  $region32: #{transformer_encoder_layer.1} parent=0 // pred_region
    _
  $region33: #{transformer_encoder_layer.1} parent=0 // pred_fallthru
    _
  %v29 = vld [vmem:[%s0] sm:$0xff]
  %v30 = vld [vmem:[%s0 + $0x8] sm:$0xff]
  %v31 = vld [vmem:[%s0 + $0x10] sm:$0xff]
  %v32 = vld [vmem:[%s0 + $0x18] sm:$0xff]
  %v33 = vld [vmem:[%s1] sm:$0xff]
  %v34 = vld [vmem:[%s1 + $0x8] sm:$0xff]
  %v35 = vld [vmem:[%s1 + $0x10] sm:$0xff]
  %v36 = vld [vmem:[%s1 + $0x18] sm:$0xff]
  %v37 = vld [vmem:[%s2] sm:$0x7]
  %v38 = vld [vmem:[%s3] sm:$0x1]
  %40 = vset.pattern.permute.xlu0 0
  %41 = vperm.xlu0 %40, %v33
  %v42 = vpop.permute.xlu0 %41
  %45 = vset.pattern.permute.xlu0 0
  %46 = vperm.xlu0 %45, %v34
  %v47 = vpop.permute.xlu0 %46
  %50 = vset.pattern.permute.xlu0 0
  %51 = vperm.xlu0 %50, %v35
  %v52 = vpop.permute.xlu0 %51
  %55 = vset.pattern.permute.xlu0 0
  %56 = vperm.xlu0 %55, %v36
  %v57 = vpop.permute.xlu0 %56
  %v59 = vlaneseq
  %v60 = vshrl.u32 %v59, 7
  %v61 = vsub.s32 0, %v60
  %v62 = vrot.slane %v37, %v61
  %v63 = vmul.f32 %v42, %v62
  %v64 = vmul.f32 %v47, %v62
  %v65 = vmul.f32 %v52, %v62
  %v66 = vmul.f32 %v57, %v62
  %v68 = vlaneseq
  %v69 = vshrl.u32 %v68, 7
  %v70 = vsub.s32 0, %v69
  %v71 = vrot.slane %v38, %v70
  %v73 = vadd.f32 %v71, %v63
  %v74 = vadd.f32 %v71, %v64
  %v75 = vadd.f32 %v71, %v65
  %v76 = vadd.f32 %v71, %v66
  %77 = vset.pattern.permute.xlu0 1
  %78 = vperm.xlu0 %77, %v33
  %v79 = vpop.permute.xlu0 %78
  %81 = vset.pattern.permute.xlu0 1
  %82 = vperm.xlu0 %81, %v34
  %v83 = vpop.permute.xlu0 %82
  %85 = vset.pattern.permute.xlu0 1
  %86 = vperm.xlu0 %85, %v35
  %v87 = vpop.permute.xlu0 %86
  %89 = vset.pattern.permute.xlu0 1
  %90 = vperm.xlu0 %89, %v36
  %v91 = vpop.permute.xlu0 %90
  %v93 = vlaneseq
  %v94 = vshrl.u32 %v93, 7
  %v95 = vsub.s32 1, %v94
  %v96 = vrot.slane %v37, %v95
  %v97 = vmul.f32 %v79, %v96
  %v98 = vmul.f32 %v83, %v96
  %v99 = vmul.f32 %v87, %v96
  %v100 = vmul.f32 %v91, %v96
  %v101 = vadd.f32 %v73, %v97
  %v102 = vadd.f32 %v74, %v98
  %v103 = vadd.f32 %v75, %v99
  %v104 = vadd.f32 %v76, %v100
  %105 = vset.pattern.permute.xlu0 2
  %106 = vperm.xlu0 %105, %v33
  %v107 = vpop.permute.xlu0 %106
  %109 = vset.pattern.permute.xlu0 2
  %110 = vperm.xlu0 %109, %v34
  %v111 = vpop.permute.xlu0 %110
  %113 = vset.pattern.permute.xlu0 2
  %114 = vperm.xlu0 %113, %v35
  %v115 = vpop.permute.xlu0 %114
  %117 = vset.pattern.permute.xlu0 2
  %118 = vperm.xlu0 %117, %v36
  %v119 = vpop.permute.xlu0 %118
  %v121 = vlaneseq
  %v122 = vshrl.u32 %v121, 7
  %v123 = vsub.s32 2, %v122
  %v124 = vrot.slane %v37, %v123
  %v125 = vmul.f32 %v107, %v124
  %v126 = vmul.f32 %v111, %v124
  %v127 = vmul.f32 %v115, %v124
  %v128 = vmul.f32 %v119, %v124
  %v129 = vadd.f32 %v101, %v125
  %v130 = vadd.f32 %v102, %v126
  %v131 = vadd.f32 %v103, %v127
  %v132 = vadd.f32 %v104, %v128
  %v133 = vadd.f32 %v29, %v129
  %v134 = vadd.f32 %v30, %v130
  %v135 = vadd.f32 %v31, %v131
  %v136 = vadd.f32 %v32, %v132
  %v137 = vld [vmem:[%s4] sm:$0xff]
  %v138 = vld [vmem:[%s4 + $0x8] sm:$0xff]
  %v139 = vld [vmem:[%s4 + $0x10] sm:$0xff]
  %v140 = vld [vmem:[%s4 + $0x18] sm:$0xff]
  %v141 = vld [vmem:[%s5] sm:$0x1]
  %v143 = vlaneseq
  %v144 = vshrl.u32 %v143, 7
  %v145 = vsub.s32 0, %v144
  %v146 = vrot.slane %v141, %v145
  %vm148 = vcmask 261120
  %v150 = vsel %vm148, %v133, 0
  %v153 = vsel %vm148, %v134, 0
  %v156 = vsel %vm148, %v135, 0
  %v159 = vsel %vm148, %v136, 0
  %161 = vmatprep.subr.mxu0 0.0
  %162 = vmatpush1.msra.mxu0 %v137
  %163 = vmatprep.subr.mxu0 0.0
  %164 = vmatpush1.msra.mxu0 %v138
  %165 = vmatprep.subr.mxu0 0.0
  %166 = vmatpush1.msra.mxu0 %v139
  %167 = vmatprep.subr.mxu0 0.0
  %168 = vmatpush1.msra.mxu0 %v140
  %169 = vmatprep.subr.mxu0 0.0
  %170 = vmatpush1.msra.mxu0 0.0
  %171 = vmatprep.subr.mxu0 0.0
  %172 = vmatpush1.msra.mxu0 0.0
  %173 = vmatprep.subr.mxu0 0.0
  %174 = vmatpush1.msra.mxu0 0.0
  %175 = vmatprep.subr.mxu0 0.0
  %176 = vmatpush1.msra.mxu0 0.0
  %177 = vmatprep.subr.mxu0 0.0
  %178 = vmatpush1.msra.mxu0 0.0
  %179 = vmatprep.subr.mxu0 0.0
  %180 = vmatpush1.msra.mxu0 0.0
  %181 = vmatprep.subr.mxu0 0.0
  %182 = vmatpush1.msra.mxu0 0.0
  %183 = vmatprep.subr.mxu0 0.0
  %184 = vmatpush1.msra.mxu0 0.0
  %185 = vmatprep.subr.mxu0 0.0
  %186 = vmatpush1.msra.mxu0 0.0
  %187 = vmatprep.subr.mxu0 0.0
  %188 = vmatpush1.msra.mxu0 0.0
  %189 = vmatprep.subr.mxu0 0.0
  %190 = vmatpush1.msra.mxu0 0.0
  %191 = vmatprep.subr.mxu0 0.0
  %192 = vmatpush1.msra.mxu0 0.0
  %193 = vmatprep.subr.mxu0 0.0
  %194 = vmatpush1.msra.mxu0 0.0
  %195 = vmatprep.subr.mxu0 0.0
  %196 = vmatpush1.msra.mxu0 0.0
  %197 = vmatprep.subr.mxu0 0.0
  %198 = vmatpush1.msra.mxu0 0.0
  %199 = vmatprep.subr.mxu0 0.0
  %200 = vmatpush1.msra.mxu0 0.0
  %201 = vmatprep.subr.mxu0 0.0
  %202 = vmatpush1.msra.mxu0 0.0
  %203 = vmatprep.subr.mxu0 0.0
  %204 = vmatpush1.msra.mxu0 0.0
  %205 = vmatprep.subr.mxu0 0.0
  %206 = vmatpush1.msra.mxu0 0.0
  %207 = vmatprep.subr.mxu0 0.0
  %208 = vmatpush1.msra.mxu0 0.0
  %209 = vmatprep.subr.mxu0 0.0
  %210 = vmatpush1.msra.mxu0 0.0
  %211 = vmatprep.subr.mxu0 0.0
  %212 = vmatpush1.msra.mxu0 0.0
  %213 = vmatprep.subr.mxu0 0.0
  %214 = vmatpush1.msra.mxu0 0.0
  %215 = vmatprep.subr.mxu0 0.0
  %216 = vmatpush1.msra.mxu0 0.0
  %217 = vmatprep.subr.mxu0 0.0
  %218 = vmatpush1.msra.mxu0 0.0
  %219 = vmatprep.subr.mxu0 0.0
  %220 = vmatpush1.msra.mxu0 0.0
  %221 = vmatprep.subr.mxu0 0.0
  %222 = vmatpush1.msra.mxu0 0.0
  %223 = vmatprep.subr.mxu0 0.0
  %224 = vmatpush1.msra.mxu0 0.0
  %225 = vmatprep.mubr.f32.mxu0 0.0
  %226 = vmatmul.mubr.f32.gmra.mrb[0].mxu0 %v150
  %v227 = vpop.f32.mrb[0].mxu0
  %v228 = vadd.f32 %v146, %v227
  %v229 = vpop.f32.mrb[0].mxu0
  %230 = vmatprep.mubr.f32.mxu0 0.0
  %231 = vmatmul.mubr.f32.gmra.mrb[0].mxu0 %v153
  %v232 = vpop.f32.mrb[0].mxu0
  %v233 = vadd.f32 %v146, %v232
  %v234 = vpop.f32.mrb[0].mxu0
  %235 = vmatprep.mubr.f32.mxu0 0.0
  %236 = vmatmul.mubr.f32.gmra.mrb[0].mxu0 %v156
  %v237 = vpop.f32.mrb[0].mxu0
  %v238 = vadd.f32 %v146, %v237
  %v239 = vpop.f32.mrb[0].mxu0
  %240 = vmatprep.mubr.f32.mxu0 0.0
  %241 = vmatmul.mubr.f32.gmra.mrb[0].mxu0 %v159
  %v242 = vpop.f32.mrb[0].mxu0
  %v243 = vadd.f32 %v146, %v242
  %v244 = vpop.f32.mrb[0].mxu0
  %245 = vdwg.mxu0
  %248 = vrot.lane.b32.xlu0 %v228, 96
  %v249 = vpop.permute.xlu0 %248
  %250 = vrot.lane.b32.xlu0 %v233, 96
  %v251 = vpop.permute.xlu0 %250
  %vm252 = vcmask 64512
  %v253 = vsel %vm252, %v228, 0
  %v255 = vsel %vm252, %v233, 0
  %v257 = vsel %vm252, %v249, 0
  %v259 = vsel %vm252, %v251, 0
  %261 = vmatprep.subr.mxu0 0.0
  %262 = vmatpush1.xpose.msra.mxu0 %v257
  %263 = vmatprep.subr.mxu0 0.0
  %264 = vmatpush1.xpose.msra.mxu0 %v259
  %265 = vmatprep.subr.mxu0 0.0
  %266 = vmatpush1.xpose.msra.mxu0 0.0
  %267 = vmatprep.subr.mxu0 0.0
  %268 = vmatpush1.xpose.msra.mxu0 0.0
  %269 = vmatprep.subr.mxu0 0.0
  %270 = vmatpush1.xpose.msra.mxu0 0.0
  %271 = vmatprep.subr.mxu0 0.0
  %272 = vmatpush1.xpose.msra.mxu0 0.0
  %273 = vmatprep.subr.mxu0 0.0
  %274 = vmatpush1.xpose.msra.mxu0 0.0
  %275 = vmatprep.subr.mxu0 0.0
  %276 = vmatpush1.xpose.msra.mxu0 0.0
  %277 = vmatprep.subr.mxu0 0.0
  %278 = vmatpush1.xpose.msra.mxu0 0.0
  %279 = vmatprep.subr.mxu0 0.0
  %280 = vmatpush1.xpose.msra.mxu0 0.0
  %281 = vmatprep.subr.mxu0 0.0
  %282 = vmatpush1.xpose.msra.mxu0 0.0
  %283 = vmatprep.subr.mxu0 0.0
  %284 = vmatpush1.xpose.msra.mxu0 0.0
  %285 = vmatprep.subr.mxu0 0.0
  %286 = vmatpush1.xpose.msra.mxu0 0.0
  %287 = vmatprep.subr.mxu0 0.0
  %288 = vmatpush1.xpose.msra.mxu0 0.0
  %289 = vmatprep.subr.mxu0 0.0
  %290 = vmatpush1.xpose.msra.mxu0 0.0
  %291 = vmatprep.subr.mxu0 0.0
  %292 = vmatpush1.xpose.msra.mxu0 0.0
  %293 = vmatprep.subr.mxu0 0.0
  %294 = vmatpush1.xpose.msra.mxu0 0.0
  %295 = vmatprep.subr.mxu0 0.0
  %296 = vmatpush1.xpose.msra.mxu0 0.0
  %297 = vmatprep.subr.mxu0 0.0
  %298 = vmatpush1.xpose.msra.mxu0 0.0
  %299 = vmatprep.subr.mxu0 0.0
  %300 = vmatpush1.xpose.msra.mxu0 0.0
  %301 = vmatprep.subr.mxu0 0.0
  %302 = vmatpush1.xpose.msra.mxu0 0.0
  %303 = vmatprep.subr.mxu0 0.0
  %304 = vmatpush1.xpose.msra.mxu0 0.0
  %305 = vmatprep.subr.mxu0 0.0
  %306 = vmatpush1.xpose.msra.mxu0 0.0
  %307 = vmatprep.subr.mxu0 0.0
  %308 = vmatpush1.xpose.msra.mxu0 0.0
  %309 = vmatprep.subr.mxu0 0.0
  %310 = vmatpush1.xpose.msra.mxu0 0.0
  %311 = vmatprep.subr.mxu0 0.0
  %312 = vmatpush1.xpose.msra.mxu0 0.0
  %313 = vmatprep.subr.mxu0 0.0
  %314 = vmatpush1.xpose.msra.mxu0 0.0
  %315 = vmatprep.subr.mxu0 0.0
  %316 = vmatpush1.xpose.msra.mxu0 0.0
  %317 = vmatprep.subr.mxu0 0.0
  %318 = vmatpush1.xpose.msra.mxu0 0.0
  %319 = vmatprep.subr.mxu0 0.0
  %320 = vmatpush1.xpose.msra.mxu0 0.0
  %321 = vmatprep.subr.mxu0 0.0
  %322 = vmatpush1.xpose.msra.mxu0 0.0
  %323 = vmatprep.subr.mxu0 0.0
  %324 = vmatpush1.xpose.msra.mxu0 0.0
  %325 = vmatprep.mubr.f32.mxu0 0.0
  %326 = vmatmul.mubr.f32.gmra.mrb[0].mxu0 %v253
  %v327 = vpop.f32.mrb[0].mxu0
  %v328 = vadd.f32 0.0, %v327
  %v329 = vpop.f32.mrb[0].mxu0
  %330 = vmatprep.mubr.f32.mxu0 0.0
  %331 = vmatmul.mubr.f32.gmra.mrb[0].mxu0 %v255
  %v332 = vpop.f32.mrb[0].mxu0
  %v333 = vadd.f32 0.0, %v332
  %v334 = vpop.f32.mrb[0].mxu0
  %335 = vdwg.mxu0
  %336 = vrot.lane.b32.xlu0 %v228, 120
  %v337 = vpop.permute.xlu0 %336
  %338 = vrot.lane.b32.xlu0 %v233, 120
  %v339 = vpop.permute.xlu0 %338
  %340 = vrot.lane.b32.xlu0 %v228, 88
  %v341 = vpop.permute.xlu0 %340
  %342 = vrot.lane.b32.xlu0 %v233, 88
  %v343 = vpop.permute.xlu0 %342
  %v344 = vsel %vm252, %v337, 0
  %v346 = vsel %vm252, %v339, 0
  %v348 = vsel %vm252, %v341, 0
  %v350 = vsel %vm252, %v343, 0
  %352 = vmatprep.subr.mxu0 0.0
  %353 = vmatpush1.xpose.msra.mxu0 %v348
  %354 = vmatprep.subr.mxu0 0.0
  %355 = vmatpush1.xpose.msra.mxu0 %v350
  %356 = vmatprep.subr.mxu0 0.0
  %357 = vmatpush1.xpose.msra.mxu0 0.0
  %358 = vmatprep.subr.mxu0 0.0
  %359 = vmatpush1.xpose.msra.mxu0 0.0
  %360 = vmatprep.subr.mxu0 0.0
  %361 = vmatpush1.xpose.msra.mxu0 0.0
  %362 = vmatprep.subr.mxu0 0.0
  %363 = vmatpush1.xpose.msra.mxu0 0.0
  %364 = vmatprep.subr.mxu0 0.0
  %365 = vmatpush1.xpose.msra.mxu0 0.0
  %366 = vmatprep.subr.mxu0 0.0
  %367 = vmatpush1.xpose.msra.mxu0 0.0
  %368 = vmatprep.subr.mxu0 0.0
  %369 = vmatpush1.xpose.msra.mxu0 0.0
  %370 = vmatprep.subr.mxu0 0.0
  %371 = vmatpush1.xpose.msra.mxu0 0.0
  %372 = vmatprep.subr.mxu0 0.0
  %373 = vmatpush1.xpose.msra.mxu0 0.0
  %374 = vmatprep.subr.mxu0 0.0
  %375 = vmatpush1.xpose.msra.mxu0 0.0
  %376 = vmatprep.subr.mxu0 0.0
  %377 = vmatpush1.xpose.msra.mxu0 0.0
  %378 = vmatprep.subr.mxu0 0.0
  %379 = vmatpush1.xpose.msra.mxu0 0.0
  %380 = vmatprep.subr.mxu0 0.0
  %381 = vmatpush1.xpose.msra.mxu0 0.0
  %382 = vmatprep.subr.mxu0 0.0
  %383 = vmatpush1.xpose.msra.mxu0 0.0
  %384 = vmatprep.subr.mxu0 0.0
  %385 = vmatpush1.xpose.msra.mxu0 0.0
  %386 = vmatprep.subr.mxu0 0.0
  %387 = vmatpush1.xpose.msra.mxu0 0.0
  %388 = vmatprep.subr.mxu0 0.0
  %389 = vmatpush1.xpose.msra.mxu0 0.0
  %390 = vmatprep.subr.mxu0 0.0
  %391 = vmatpush1.xpose.msra.mxu0 0.0
  %392 = vmatprep.subr.mxu0 0.0
  %393 = vmatpush1.xpose.msra.mxu0 0.0
  %394 = vmatprep.subr.mxu0 0.0
  %395 = vmatpush1.xpose.msra.mxu0 0.0
  %396 = vmatprep.subr.mxu0 0.0
  %397 = vmatpush1.xpose.msra.mxu0 0.0
  %398 = vmatprep.subr.mxu0 0.0
  %399 = vmatpush1.xpose.msra.mxu0 0.0
  %400 = vmatprep.subr.mxu0 0.0
  %401 = vmatpush1.xpose.msra.mxu0 0.0
  %402 = vmatprep.subr.mxu0 0.0
  %403 = vmatpush1.xpose.msra.mxu0 0.0
  %404 = vmatprep.subr.mxu0 0.0
  %405 = vmatpush1.xpose.msra.mxu0 0.0
  %406 = vmatprep.subr.mxu0 0.0
  %407 = vmatpush1.xpose.msra.mxu0 0.0
  %408 = vmatprep.subr.mxu0 0.0
  %409 = vmatpush1.xpose.msra.mxu0 0.0
  %410 = vmatprep.subr.mxu0 0.0
  %411 = vmatpush1.xpose.msra.mxu0 0.0
  %412 = vmatprep.subr.mxu0 0.0
  %413 = vmatpush1.xpose.msra.mxu0 0.0
  %414 = vmatprep.subr.mxu0 0.0
  %415 = vmatpush1.xpose.msra.mxu0 0.0
  %416 = vmatprep.mubr.f32.mxu0 0.0
  %417 = vmatmul.mubr.f32.gmra.mrb[0].mxu0 %v344
  %v418 = vpop.f32.mrb[0].mxu0
  %v419 = vadd.f32 0.0, %v418
  %v420 = vpop.f32.mrb[0].mxu0
  %421 = vmatprep.mubr.f32.mxu0 0.0
  %422 = vmatmul.mubr.f32.gmra.mrb[0].mxu0 %v346
  %v423 = vpop.f32.mrb[0].mxu0
  %v424 = vadd.f32 0.0, %v423
  %v425 = vpop.f32.mrb[0].mxu0
  %426 = vdwg.mxu0
  %427 = vrot.lane.b32.xlu0 %v228, 112
  %v428 = vpop.permute.xlu0 %427
  %429 = vrot.lane.b32.xlu0 %v233, 112
  %v430 = vpop.permute.xlu0 %429
  %431 = vrot.lane.b32.xlu0 %v228, 80
  %v432 = vpop.permute.xlu0 %431
  %433 = vrot.lane.b32.xlu0 %v233, 80
  %v434 = vpop.permute.xlu0 %433
  %v435 = vsel %vm252, %v428, 0
  %v437 = vsel %vm252, %v430, 0
  %v439 = vsel %vm252, %v432, 0
  %v441 = vsel %vm252, %v434, 0
  %443 = vmatprep.subr.mxu0 0.0
  %444 = vmatpush1.xpose.msra.mxu0 %v439
  %445 = vmatprep.subr.mxu0 0.0
  %446 = vmatpush1.xpose.msra.mxu0 %v441
  %447 = vmatprep.subr.mxu0 0.0
  %448 = vmatpush1.xpose.msra.mxu0 0.0
  %449 = vmatprep.subr.mxu0 0.0
  %450 = vmatpush1.xpose.msra.mxu0 0.0
  %451 = vmatprep.subr.mxu0 0.0
  %452 = vmatpush1.xpose.msra.mxu0 0.0
  %453 = vmatprep.subr.mxu0 0.0
  %454 = vmatpush1.xpose.msra.mxu0 0.0
  %455 = vmatprep.subr.mxu0 0.0
  %456 = vmatpush1.xpose.msra.mxu0 0.0
  %457 = vmatprep.subr.mxu0 0.0
  %458 = vmatpush1.xpose.msra.mxu0 0.0
  %459 = vmatprep.subr.mxu0 0.0
  %460 = vmatpush1.xpose.msra.mxu0 0.0
  %461 = vmatprep.subr.mxu0 0.0
  %462 = vmatpush1.xpose.msra.mxu0 0.0
  %463 = vmatprep.subr.mxu0 0.0
  %464 = vmatpush1.xpose.msra.mxu0 0.0
  %465 = vmatprep.subr.mxu0 0.0
  %466 = vmatpush1.xpose.msra.mxu0 0.0
  %467 = vmatprep.subr.mxu0 0.0
  %468 = vmatpush1.xpose.msra.mxu0 0.0
  %469 = vmatprep.subr.mxu0 0.0
  %470 = vmatpush1.xpose.msra.mxu0 0.0
  %471 = vmatprep.subr.mxu0 0.0
  %472 = vmatpush1.xpose.msra.mxu0 0.0
  %473 = vmatprep.subr.mxu0 0.0
  %474 = vmatpush1.xpose.msra.mxu0 0.0
  %475 = vmatprep.subr.mxu0 0.0
  %476 = vmatpush1.xpose.msra.mxu0 0.0
  %477 = vmatprep.subr.mxu0 0.0
  %478 = vmatpush1.xpose.msra.mxu0 0.0
  %479 = vmatprep.subr.mxu0 0.0
  %480 = vmatpush1.xpose.msra.mxu0 0.0
  %481 = vmatprep.subr.mxu0 0.0
  %482 = vmatpush1.xpose.msra.mxu0 0.0
  %483 = vmatprep.subr.mxu0 0.0
  %484 = vmatpush1.xpose.msra.mxu0 0.0
  %485 = vmatprep.subr.mxu0 0.0
  %486 = vmatpush1.xpose.msra.mxu0 0.0
  %487 = vmatprep.subr.mxu0 0.0
  %488 = vmatpush1.xpose.msra.mxu0 0.0
  %489 = vmatprep.subr.mxu0 0.0
  %490 = vmatpush1.xpose.msra.mxu0 0.0
  %491 = vmatprep.subr.mxu0 0.0
  %492 = vmatpush1.xpose.msra.mxu0 0.0
  %493 = vmatprep.subr.mxu0 0.0
  %494 = vmatpush1.xpose.msra.mxu0 0.0
  %495 = vmatprep.subr.mxu0 0.0
  %496 = vmatpush1.xpose.msra.mxu0 0.0
  %497 = vmatprep.subr.mxu0 0.0
  %498 = vmatpush1.xpose.msra.mxu0 0.0
  %499 = vmatprep.subr.mxu0 0.0
  %500 = vmatpush1.xpose.msra.mxu0 0.0
  %501 = vmatprep.subr.mxu0 0.0
  %502 = vmatpush1.xpose.msra.mxu0 0.0
  %503 = vmatprep.subr.mxu0 0.0
  %504 = vmatpush1.xpose.msra.mxu0 0.0
  %505 = vmatprep.subr.mxu0 0.0
  %506 = vmatpush1.xpose.msra.mxu0 0.0
  %507 = vmatprep.mubr.f32.mxu0 0.0
  %508 = vmatmul.mubr.f32.gmra.mrb[0].mxu0 %v435
  %v509 = vpop.f32.mrb[0].mxu0
  %v510 = vadd.f32 0.0, %v509
  %v511 = vpop.f32.mrb[0].mxu0
  %512 = vmatprep.mubr.f32.mxu0 0.0
  %513 = vmatmul.mubr.f32.gmra.mrb[0].mxu0 %v437
  %v514 = vpop.f32.mrb[0].mxu0
  %v515 = vadd.f32 0.0, %v514
  %v516 = vpop.f32.mrb[0].mxu0
  %517 = vdwg.mxu0
  %518 = vrot.lane.b32.xlu0 %v228, 104
  %v519 = vpop.permute.xlu0 %518
  %520 = vrot.lane.b32.xlu0 %v233, 104
  %v521 = vpop.permute.xlu0 %520
  %522 = vrot.lane.b32.xlu0 %v228, 72
  %v523 = vpop.permute.xlu0 %522
  %524 = vrot.lane.b32.xlu0 %v233, 72
  %v525 = vpop.permute.xlu0 %524
  %v526 = vsel %vm252, %v519, 0
  %v528 = vsel %vm252, %v521, 0
  %v530 = vsel %vm252, %v523, 0
  %v532 = vsel %vm252, %v525, 0
  %534 = vmatprep.subr.mxu0 0.0
  %535 = vmatpush1.xpose.msra.mxu0 %v530
  %536 = vmatprep.subr.mxu0 0.0
  %537 = vmatpush1.xpose.msra.mxu0 %v532
  %538 = vmatprep.subr.mxu0 0.0
  %539 = vmatpush1.xpose.msra.mxu0 0.0
  %540 = vmatprep.subr.mxu0 0.0
  %541 = vmatpush1.xpose.msra.mxu0 0.0
  %542 = vmatprep.subr.mxu0 0.0
  %543 = vmatpush1.xpose.msra.mxu0 0.0
  %544 = vmatprep.subr.mxu0 0.0
  %545 = vmatpush1.xpose.msra.mxu0 0.0
  %546 = vmatprep.subr.mxu0 0.0
  %547 = vmatpush1.xpose.msra.mxu0 0.0
  %548 = vmatprep.subr.mxu0 0.0
  %549 = vmatpush1.xpose.msra.mxu0 0.0
  %550 = vmatprep.subr.mxu0 0.0
  %551 = vmatpush1.xpose.msra.mxu0 0.0
  %552 = vmatprep.subr.mxu0 0.0
  %553 = vmatpush1.xpose.msra.mxu0 0.0
  %554 = vmatprep.subr.mxu0 0.0
  %555 = vmatpush1.xpose.msra.mxu0 0.0
  %556 = vmatprep.subr.mxu0 0.0
  %557 = vmatpush1.xpose.msra.mxu0 0.0
  %558 = vmatprep.subr.mxu0 0.0
  %559 = vmatpush1.xpose.msra.mxu0 0.0
  %560 = vmatprep.subr.mxu0 0.0
  %561 = vmatpush1.xpose.msra.mxu0 0.0
  %562 = vmatprep.subr.mxu0 0.0
  %563 = vmatpush1.xpose.msra.mxu0 0.0
  %564 = vmatprep.subr.mxu0 0.0
  %565 = vmatpush1.xpose.msra.mxu0 0.0
  %566 = vmatprep.subr.mxu0 0.0
  %567 = vmatpush1.xpose.msra.mxu0 0.0
  %568 = vmatprep.subr.mxu0 0.0
  %569 = vmatpush1.xpose.msra.mxu0 0.0
  %570 = vmatprep.subr.mxu0 0.0
  %571 = vmatpush1.xpose.msra.mxu0 0.0
  %572 = vmatprep.subr.mxu0 0.0
  %573 = vmatpush1.xpose.msra.mxu0 0.0
  %574 = vmatprep.subr.mxu0 0.0
  %575 = vmatpush1.xpose.msra.mxu0 0.0
  %576 = vmatprep.subr.mxu0 0.0
  %577 = vmatpush1.xpose.msra.mxu0 0.0
  %578 = vmatprep.subr.mxu0 0.0
  %579 = vmatpush1.xpose.msra.mxu0 0.0
  %580 = vmatprep.subr.mxu0 0.0
  %581 = vmatpush1.xpose.msra.mxu0 0.0
  %582 = vmatprep.subr.mxu0 0.0
  %583 = vmatpush1.xpose.msra.mxu0 0.0
  %584 = vmatprep.subr.mxu0 0.0
  %585 = vmatpush1.xpose.msra.mxu0 0.0
  %586 = vmatprep.subr.mxu0 0.0
  %587 = vmatpush1.xpose.msra.mxu0 0.0
  %588 = vmatprep.subr.mxu0 0.0
  %589 = vmatpush1.xpose.msra.mxu0 0.0
  %590 = vmatprep.subr.mxu0 0.0
  %591 = vmatpush1.xpose.msra.mxu0 0.0
  %592 = vmatprep.subr.mxu0 0.0
  %593 = vmatpush1.xpose.msra.mxu0 0.0
  %594 = vmatprep.subr.mxu0 0.0
  %595 = vmatpush1.xpose.msra.mxu0 0.0
  %596 = vmatprep.subr.mxu0 0.0
  %597 = vmatpush1.xpose.msra.mxu0 0.0
  %598 = vmatprep.mubr.f32.mxu0 0.0
  %599 = vmatmul.mubr.f32.gmra.mrb[0].mxu0 %v526
  %v600 = vpop.f32.mrb[0].mxu0
  %v601 = vadd.f32 0.0, %v600
  %v602 = vpop.f32.mrb[0].mxu0
  %603 = vmatprep.mubr.f32.mxu0 0.0
  %604 = vmatmul.mubr.f32.gmra.mrb[0].mxu0 %v528
  %v605 = vpop.f32.mrb[0].mxu0
  %v606 = vadd.f32 0.0, %v605
  %v607 = vpop.f32.mrb[0].mxu0
  %608 = vdwg.mxu0
  %611 = vrot.lane.b32.xlu0 %v238, 96
  %v612 = vpop.permute.xlu0 %611
  %613 = vrot.lane.b32.xlu0 %v243, 96
  %v614 = vpop.permute.xlu0 %613
  %v615 = vsel %vm252, %v238, 0
  %v617 = vsel %vm252, %v243, 0
  %v619 = vsel %vm252, %v612, 0
  %v621 = vsel %vm252, %v614, 0
  %623 = vmatprep.subr.mxu0 0.0
  %624 = vmatpush1.xpose.msra.mxu0 %v619
  %625 = vmatprep.subr.mxu0 0.0
  %626 = vmatpush1.xpose.msra.mxu0 %v621
  %627 = vmatprep.subr.mxu0 0.0
  %628 = vmatpush1.xpose.msra.mxu0 0.0
  %629 = vmatprep.subr.mxu0 0.0
  %630 = vmatpush1.xpose.msra.mxu0 0.0
  %631 = vmatprep.subr.mxu0 0.0
  %632 = vmatpush1.xpose.msra.mxu0 0.0
  %633 = vmatprep.subr.mxu0 0.0
  %634 = vmatpush1.xpose.msra.mxu0 0.0
  %635 = vmatprep.subr.mxu0 0.0
  %636 = vmatpush1.xpose.msra.mxu0 0.0
  %637 = vmatprep.subr.mxu0 0.0
  %638 = vmatpush1.xpose.msra.mxu0 0.0
  %639 = vmatprep.subr.mxu0 0.0
  %640 = vmatpush1.xpose.msra.mxu0 0.0
  %641 = vmatprep.subr.mxu0 0.0
  %642 = vmatpush1.xpose.msra.mxu0 0.0
  %643 = vmatprep.subr.mxu0 0.0
  %644 = vmatpush1.xpose.msra.mxu0 0.0
  %645 = vmatprep.subr.mxu0 0.0
  %646 = vmatpush1.xpose.msra.mxu0 0.0
  %647 = vmatprep.subr.mxu0 0.0
  %648 = vmatpush1.xpose.msra.mxu0 0.0
  %649 = vmatprep.subr.mxu0 0.0
  %650 = vmatpush1.xpose.msra.mxu0 0.0
  %651 = vmatprep.subr.mxu0 0.0
  %652 = vmatpush1.xpose.msra.mxu0 0.0
  %653 = vmatprep.subr.mxu0 0.0
  %654 = vmatpush1.xpose.msra.mxu0 0.0
  %655 = vmatprep.subr.mxu0 0.0
  %656 = vmatpush1.xpose.msra.mxu0 0.0
  %657 = vmatprep.subr.mxu0 0.0
  %658 = vmatpush1.xpose.msra.mxu0 0.0
  %659 = vmatprep.subr.mxu0 0.0
  %660 = vmatpush1.xpose.msra.mxu0 0.0
  %661 = vmatprep.subr.mxu0 0.0
  %662 = vmatpush1.xpose.msra.mxu0 0.0
  %663 = vmatprep.subr.mxu0 0.0
  %664 = vmatpush1.xpose.msra.mxu0 0.0
  %665 = vmatprep.subr.mxu0 0.0
  %666 = vmatpush1.xpose.msra.mxu0 0.0
  %667 = vmatprep.subr.mxu0 0.0
  %668 = vmatpush1.xpose.msra.mxu0 0.0
  %669 = vmatprep.subr.mxu0 0.0
  %670 = vmatpush1.xpose.msra.mxu0 0.0
  %671 = vmatprep.subr.mxu0 0.0
  %672 = vmatpush1.xpose.msra.mxu0 0.0
  %673 = vmatprep.subr.mxu0 0.0
  %674 = vmatpush1.xpose.msra.mxu0 0.0
  %675 = vmatprep.subr.mxu0 0.0
  %676 = vmatpush1.xpose.msra.mxu0 0.0
  %677 = vmatprep.subr.mxu0 0.0
  %678 = vmatpush1.xpose.msra.mxu0 0.0
  %679 = vmatprep.subr.mxu0 0.0
  %680 = vmatpush1.xpose.msra.mxu0 0.0
  %681 = vmatprep.subr.mxu0 0.0
  %682 = vmatpush1.xpose.msra.mxu0 0.0
  %683 = vmatprep.subr.mxu0 0.0
  %684 = vmatpush1.xpose.msra.mxu0 0.0
  %685 = vmatprep.subr.mxu0 0.0
  %686 = vmatpush1.xpose.msra.mxu0 0.0
  %687 = vmatprep.mubr.f32.mxu0 0.0
  %688 = vmatmul.mubr.f32.gmra.mrb[0].mxu0 %v615
  %v689 = vpop.f32.mrb[0].mxu0
  %v690 = vadd.f32 0.0, %v689
  %v691 = vpop.f32.mrb[0].mxu0
  %692 = vmatprep.mubr.f32.mxu0 0.0
  %693 = vmatmul.mubr.f32.gmra.mrb[0].mxu0 %v617
  %v694 = vpop.f32.mrb[0].mxu0
  %v695 = vadd.f32 0.0, %v694
  %v696 = vpop.f32.mrb[0].mxu0
  %697 = vdwg.mxu0
  %698 = vrot.lane.b32.xlu0 %v238, 120
  %v699 = vpop.permute.xlu0 %698
  %700 = vrot.lane.b32.xlu0 %v243, 120
  %v701 = vpop.permute.xlu0 %700
  %702 = vrot.lane.b32.xlu0 %v238, 88
  %v703 = vpop.permute.xlu0 %702
  %704 = vrot.lane.b32.xlu0 %v243, 88
  %v705 = vpop.permute.xlu0 %704
  %v706 = vsel %vm252, %v699, 0
  %v708 = vsel %vm252, %v701, 0
  %v710 = vsel %vm252, %v703, 0
  %v712 = vsel %vm252, %v705, 0
  %714 = vmatprep.subr.mxu0 0.0
  %715 = vmatpush1.xpose.msra.mxu0 %v710
  %716 = vmatprep.subr.mxu0 0.0
  %717 = vmatpush1.xpose.msra.mxu0 %v712
  %718 = vmatprep.subr.mxu0 0.0
  %719 = vmatpush1.xpose.msra.mxu0 0.0
  %720 = vmatprep.subr.mxu0 0.0
  %721 = vmatpush1.xpose.msra.mxu0 0.0
  %722 = vmatprep.subr.mxu0 0.0
  %723 = vmatpush1.xpose.msra.mxu0 0.0
  %724 = vmatprep.subr.mxu0 0.0
  %725 = vmatpush1.xpose.msra.mxu0 0.0
  %726 = vmatprep.subr.mxu0 0.0
  %727 = vmatpush1.xpose.msra.mxu0 0.0
  %728 = vmatprep.subr.mxu0 0.0
  %729 = vmatpush1.xpose.msra.mxu0 0.0
  %730 = vmatprep.subr.mxu0 0.0
  %731 = vmatpush1.xpose.msra.mxu0 0.0
  %732 = vmatprep.subr.mxu0 0.0
  %733 = vmatpush1.xpose.msra.mxu0 0.0
  %734 = vmatprep.subr.mxu0 0.0
  %735 = vmatpush1.xpose.msra.mxu0 0.0
  %736 = vmatprep.subr.mxu0 0.0
  %737 = vmatpush1.xpose.msra.mxu0 0.0
  %738 = vmatprep.subr.mxu0 0.0
  %739 = vmatpush1.xpose.msra.mxu0 0.0
  %740 = vmatprep.subr.mxu0 0.0
  %741 = vmatpush1.xpose.msra.mxu0 0.0
  %742 = vmatprep.subr.mxu0 0.0
  %743 = vmatpush1.xpose.msra.mxu0 0.0
  %744 = vmatprep.subr.mxu0 0.0
  %745 = vmatpush1.xpose.msra.mxu0 0.0
  %746 = vmatprep.subr.mxu0 0.0
  %747 = vmatpush1.xpose.msra.mxu0 0.0
  %748 = vmatprep.subr.mxu0 0.0
  %749 = vmatpush1.xpose.msra.mxu0 0.0
  %750 = vmatprep.subr.mxu0 0.0
  %751 = vmatpush1.xpose.msra.mxu0 0.0
  %752 = vmatprep.subr.mxu0 0.0
  %753 = vmatpush1.xpose.msra.mxu0 0.0
  %754 = vmatprep.subr.mxu0 0.0
  %755 = vmatpush1.xpose.msra.mxu0 0.0
  %756 = vmatprep.subr.mxu0 0.0
  %757 = vmatpush1.xpose.msra.mxu0 0.0
  %758 = vmatprep.subr.mxu0 0.0
  %759 = vmatpush1.xpose.msra.mxu0 0.0
  %760 = vmatprep.subr.mxu0 0.0
  %761 = vmatpush1.xpose.msra.mxu0 0.0
  %762 = vmatprep.subr.mxu0 0.0
  %763 = vmatpush1.xpose.msra.mxu0 0.0
  %764 = vmatprep.subr.mxu0 0.0
  %765 = vmatpush1.xpose.msra.mxu0 0.0
  %766 = vmatprep.subr.mxu0 0.0
  %767 = vmatpush1.xpose.msra.mxu0 0.0
  %768 = vmatprep.subr.mxu0 0.0
  %769 = vmatpush1.xpose.msra.mxu0 0.0
  %770 = vmatprep.subr.mxu0 0.0
  %771 = vmatpush1.xpose.msra.mxu0 0.0
  %772 = vmatprep.subr.mxu0 0.0
  %773 = vmatpush1.xpose.msra.mxu0 0.0
  %774 = vmatprep.subr.mxu0 0.0
  %775 = vmatpush1.xpose.msra.mxu0 0.0
  %776 = vmatprep.subr.mxu0 0.0
  %777 = vmatpush1.xpose.msra.mxu0 0.0
  %778 = vmatprep.mubr.f32.mxu0 0.0
  %779 = vmatmul.mubr.f32.gmra.mrb[0].mxu0 %v706
  %v780 = vpop.f32.mrb[0].mxu0
  %v781 = vadd.f32 0.0, %v780
  %v782 = vpop.f32.mrb[0].mxu0
  %783 = vmatprep.mubr.f32.mxu0 0.0
  %784 = vmatmul.mubr.f32.gmra.mrb[0].mxu0 %v708
  %v785 = vpop.f32.mrb[0].mxu0
  %v786 = vadd.f32 0.0, %v785
  %v787 = vpop.f32.mrb[0].mxu0
  %788 = vdwg.mxu0
  %789 = vrot.lane.b32.xlu0 %v238, 112
  %v790 = vpop.permute.xlu0 %789
  %791 = vrot.lane.b32.xlu0 %v243, 112
  %v792 = vpop.permute.xlu0 %791
  %793 = vrot.lane.b32.xlu0 %v238, 80
  %v794 = vpop.permute.xlu0 %793
  %795 = vrot.lane.b32.xlu0 %v243, 80
  %v796 = vpop.permute.xlu0 %795
  %v797 = vsel %vm252, %v790, 0
  %v799 = vsel %vm252, %v792, 0
  %v801 = vsel %vm252, %v794, 0
  %v803 = vsel %vm252, %v796, 0
  %805 = vmatprep.subr.mxu0 0.0
  %806 = vmatpush1.xpose.msra.mxu0 %v801
  %807 = vmatprep.subr.mxu0 0.0
  %808 = vmatpush1.xpose.msra.mxu0 %v803
  %809 = vmatprep.subr.mxu0 0.0
  %810 = vmatpush1.xpose.msra.mxu0 0.0
  %811 = vmatprep.subr.mxu0 0.0
  %812 = vmatpush1.xpose.msra.mxu0 0.0
  %813 = vmatprep.subr.mxu0 0.0
  %814 = vmatpush1.xpose.msra.mxu0 0.0
  %815 = vmatprep.subr.mxu0 0.0
  %816 = vmatpush1.xpose.msra.mxu0 0.0
  %817 = vmatprep.subr.mxu0 0.0
  %818 = vmatpush1.xpose.msra.mxu0 0.0
  %819 = vmatprep.subr.mxu0 0.0
  %820 = vmatpush1.xpose.msra.mxu0 0.0
  %821 = vmatprep.subr.mxu0 0.0
  %822 = vmatpush1.xpose.msra.mxu0 0.0
  %823 = vmatprep.subr.mxu0 0.0
  %824 = vmatpush1.xpose.msra.mxu0 0.0
  %825 = vmatprep.subr.mxu0 0.0
  %826 = vmatpush1.xpose.msra.mxu0 0.0
  %827 = vmatprep.subr.mxu0 0.0
  %828 = vmatpush1.xpose.msra.mxu0 0.0
  %829 = vmatprep.subr.mxu0 0.0
  %830 = vmatpush1.xpose.msra.mxu0 0.0
  %831 = vmatprep.subr.mxu0 0.0
  %832 = vmatpush1.xpose.msra.mxu0 0.0
  %833 = vmatprep.subr.mxu0 0.0
  %834 = vmatpush1.xpose.msra.mxu0 0.0
  %835 = vmatprep.subr.mxu0 0.0
  %836 = vmatpush1.xpose.msra.mxu0 0.0
  %837 = vmatprep.subr.mxu0 0.0
  %838 = vmatpush1.xpose.msra.mxu0 0.0
  %839 = vmatprep.subr.mxu0 0.0
  %840 = vmatpush1.xpose.msra.mxu0 0.0
  %841 = vmatprep.subr.mxu0 0.0
  %842 = vmatpush1.xpose.msra.mxu0 0.0
  %843 = vmatprep.subr.mxu0 0.0
  %844 = vmatpush1.xpose.msra.mxu0 0.0
  %845 = vmatprep.subr.mxu0 0.0
  %846 = vmatpush1.xpose.msra.mxu0 0.0
  %847 = vmatprep.subr.mxu0 0.0
  %848 = vmatpush1.xpose.msra.mxu0 0.0
  %849 = vmatprep.subr.mxu0 0.0
  %850 = vmatpush1.xpose.msra.mxu0 0.0
  %851 = vmatprep.subr.mxu0 0.0
  %852 = vmatpush1.xpose.msra.mxu0 0.0
  %853 = vmatprep.subr.mxu0 0.0
  %854 = vmatpush1.xpose.msra.mxu0 0.0
  %855 = vmatprep.subr.mxu0 0.0
  %856 = vmatpush1.xpose.msra.mxu0 0.0
  %857 = vmatprep.subr.mxu0 0.0
  %858 = vmatpush1.xpose.msra.mxu0 0.0
  %859 = vmatprep.subr.mxu0 0.0
  %860 = vmatpush1.xpose.msra.mxu0 0.0
  %861 = vmatprep.subr.mxu0 0.0
  %862 = vmatpush1.xpose.msra.mxu0 0.0
  %863 = vmatprep.subr.mxu0 0.0
  %864 = vmatpush1.xpose.msra.mxu0 0.0
  %865 = vmatprep.subr.mxu0 0.0
  %866 = vmatpush1.xpose.msra.mxu0 0.0
  %867 = vmatprep.subr.mxu0 0.0
  %868 = vmatpush1.xpose.msra.mxu0 0.0
  %869 = vmatprep.mubr.f32.mxu0 0.0
  %870 = vmatmul.mubr.f32.gmra.mrb[0].mxu0 %v797
  %v871 = vpop.f32.mrb[0].mxu0
  %v872 = vadd.f32 0.0, %v871
  %v873 = vpop.f32.mrb[0].mxu0
  %874 = vmatprep.mubr.f32.mxu0 0.0
  %875 = vmatmul.mubr.f32.gmra.mrb[0].mxu0 %v799
  %v876 = vpop.f32.mrb[0].mxu0
  %v877 = vadd.f32 0.0, %v876
  %v878 = vpop.f32.mrb[0].mxu0
  %879 = vdwg.mxu0
  %880 = vrot.lane.b32.xlu0 %v238, 104
  %v881 = vpop.permute.xlu0 %880
  %882 = vrot.lane.b32.xlu0 %v243, 104
  %v883 = vpop.permute.xlu0 %882
  %884 = vrot.lane.b32.xlu0 %v238, 72
  %v885 = vpop.permute.xlu0 %884
  %886 = vrot.lane.b32.xlu0 %v243, 72
  %v887 = vpop.permute.xlu0 %886
  %v888 = vsel %vm252, %v881, 0
  %v890 = vsel %vm252, %v883, 0
  %v892 = vsel %vm252, %v885, 0
  %v894 = vsel %vm252, %v887, 0
  %896 = vmatprep.subr.mxu0 0.0
  %897 = vmatpush1.xpose.msra.mxu0 %v892
  %898 = vmatprep.subr.mxu0 0.0
  %899 = vmatpush1.xpose.msra.mxu0 %v894
  %900 = vmatprep.subr.mxu0 0.0
  %901 = vmatpush1.xpose.msra.mxu0 0.0
  %902 = vmatprep.subr.mxu0 0.0
  %903 = vmatpush1.xpose.msra.mxu0 0.0
  %904 = vmatprep.subr.mxu0 0.0
  %905 = vmatpush1.xpose.msra.mxu0 0.0
  %906 = vmatprep.subr.mxu0 0.0
  %907 = vmatpush1.xpose.msra.mxu0 0.0
  %908 = vmatprep.subr.mxu0 0.0
  %909 = vmatpush1.xpose.msra.mxu0 0.0
  %910 = vmatprep.subr.mxu0 0.0
  %911 = vmatpush1.xpose.msra.mxu0 0.0
  %912 = vmatprep.subr.mxu0 0.0
  %913 = vmatpush1.xpose.msra.mxu0 0.0
  %914 = vmatprep.subr.mxu0 0.0
  %915 = vmatpush1.xpose.msra.mxu0 0.0
  %916 = vmatprep.subr.mxu0 0.0
  %917 = vmatpush1.xpose.msra.mxu0 0.0
  %918 = vmatprep.subr.mxu0 0.0
  %919 = vmatpush1.xpose.msra.mxu0 0.0
  %920 = vmatprep.subr.mxu0 0.0
  %921 = vmatpush1.xpose.msra.mxu0 0.0
  %922 = vmatprep.subr.mxu0 0.0
  %923 = vmatpush1.xpose.msra.mxu0 0.0
  %924 = vmatprep.subr.mxu0 0.0
  %925 = vmatpush1.xpose.msra.mxu0 0.0
  %926 = vmatprep.subr.mxu0 0.0
  %927 = vmatpush1.xpose.msra.mxu0 0.0
  %928 = vmatprep.subr.mxu0 0.0
  %929 = vmatpush1.xpose.msra.mxu0 0.0
  %930 = vmatprep.subr.mxu0 0.0
  %931 = vmatpush1.xpose.msra.mxu0 0.0
  %932 = vmatprep.subr.mxu0 0.0
  %933 = vmatpush1.xpose.msra.mxu0 0.0
  %934 = vmatprep.subr.mxu0 0.0
  %935 = vmatpush1.xpose.msra.mxu0 0.0
  %936 = vmatprep.subr.mxu0 0.0
  %937 = vmatpush1.xpose.msra.mxu0 0.0
  %938 = vmatprep.subr.mxu0 0.0
  %939 = vmatpush1.xpose.msra.mxu0 0.0
  %940 = vmatprep.subr.mxu0 0.0
  %941 = vmatpush1.xpose.msra.mxu0 0.0
  %942 = vmatprep.subr.mxu0 0.0
  %943 = vmatpush1.xpose.msra.mxu0 0.0
  %944 = vmatprep.subr.mxu0 0.0
  %945 = vmatpush1.xpose.msra.mxu0 0.0
  %946 = vmatprep.subr.mxu0 0.0
  %947 = vmatpush1.xpose.msra.mxu0 0.0
  %948 = vmatprep.subr.mxu0 0.0
  %949 = vmatpush1.xpose.msra.mxu0 0.0
  %950 = vmatprep.subr.mxu0 0.0
  %951 = vmatpush1.xpose.msra.mxu0 0.0
  %952 = vmatprep.subr.mxu0 0.0
  %953 = vmatpush1.xpose.msra.mxu0 0.0
  %954 = vmatprep.subr.mxu0 0.0
  %955 = vmatpush1.xpose.msra.mxu0 0.0
  %956 = vmatprep.subr.mxu0 0.0
  %957 = vmatpush1.xpose.msra.mxu0 0.0
  %958 = vmatprep.subr.mxu0 0.0
  %959 = vmatpush1.xpose.msra.mxu0 0.0
  %960 = vmatprep.mubr.f32.mxu0 0.0
  %961 = vmatmul.mubr.f32.gmra.mrb[0].mxu0 %v888
  %v962 = vpop.f32.mrb[0].mxu0
  %v963 = vadd.f32 0.0, %v962
  %v964 = vpop.f32.mrb[0].mxu0
  %965 = vmatprep.mubr.f32.mxu0 0.0
  %966 = vmatmul.mubr.f32.gmra.mrb[0].mxu0 %v890
  %v967 = vpop.f32.mrb[0].mxu0
  %v968 = vadd.f32 0.0, %v967
  %v969 = vpop.f32.mrb[0].mxu0
  %970 = vdwg.mxu0
  %vm971 = vcmask 130048
  %v972 = vsel %vm971, %v328, -inf
  %973 = vmax.xlane.f32.xlu0 %v972
  %v974 = vpop.xlane.xlu0 %973
  %v975 = vsel %vm971, %v333, -inf
  %976 = vmax.xlane.f32.xlu0 %v975
  %v977 = vpop.xlane.xlu0 %976
  %v978 = vsel %vm971, %v419, -inf
  %979 = vmax.xlane.f32.xlu0 %v978
  %v980 = vpop.xlane.xlu0 %979
  %v981 = vsel %vm971, %v424, -inf
  %982 = vmax.xlane.f32.xlu0 %v981
  %v983 = vpop.xlane.xlu0 %982
  %v984 = vsel %vm971, %v510, -inf
  %985 = vmax.xlane.f32.xlu0 %v984
  %v986 = vpop.xlane.xlu0 %985
  %v987 = vsel %vm971, %v515, -inf
  %988 = vmax.xlane.f32.xlu0 %v987
  %v989 = vpop.xlane.xlu0 %988
  %v990 = vsel %vm971, %v601, -inf
  %991 = vmax.xlane.f32.xlu0 %v990
  %v992 = vpop.xlane.xlu0 %991
  %v993 = vsel %vm971, %v606, -inf
  %994 = vmax.xlane.f32.xlu0 %v993
  %v995 = vpop.xlane.xlu0 %994
  %v996 = vsel %vm971, %v690, -inf
  %997 = vmax.xlane.f32.xlu0 %v996
  %v998 = vpop.xlane.xlu0 %997
  %v999 = vsel %vm971, %v695, -inf
  %1000 = vmax.xlane.f32.xlu0 %v999
  %v1001 = vpop.xlane.xlu0 %1000
  %v1002 = vsel %vm971, %v781, -inf
  %1003 = vmax.xlane.f32.xlu0 %v1002
  %v1004 = vpop.xlane.xlu0 %1003
  %v1005 = vsel %vm971, %v786, -inf
  %1006 = vmax.xlane.f32.xlu0 %v1005
  %v1007 = vpop.xlane.xlu0 %1006
  %v1008 = vsel %vm971, %v872, -inf
  %1009 = vmax.xlane.f32.xlu0 %v1008
  %v1010 = vpop.xlane.xlu0 %1009
  %v1011 = vsel %vm971, %v877, -inf
  %1012 = vmax.xlane.f32.xlu0 %v1011
  %v1013 = vpop.xlane.xlu0 %1012
  %v1014 = vsel %vm971, %v963, -inf
  %1015 = vmax.xlane.f32.xlu0 %v1014
  %v1016 = vpop.xlane.xlu0 %1015
  %v1017 = vsel %vm971, %v968, -inf
  %1018 = vmax.xlane.f32.xlu0 %v1017
  %v1019 = vpop.xlane.xlu0 %1018
  %v1020 = vsub.f32 %v328, %v974
  %v1021 = vsub.f32 %v333, %v977
  %v1022 = vsub.f32 %v419, %v980
  %v1023 = vsub.f32 %v424, %v983
  %v1024 = vsub.f32 %v510, %v986
  %v1025 = vsub.f32 %v515, %v989
  %v1026 = vsub.f32 %v601, %v992
  %v1027 = vsub.f32 %v606, %v995
  %v1028 = vsub.f32 %v690, %v998
  %v1029 = vsub.f32 %v695, %v1001
  %v1030 = vsub.f32 %v781, %v1004
  %v1031 = vsub.f32 %v786, %v1007
  %v1032 = vsub.f32 %v872, %v1010
  %v1033 = vsub.f32 %v877, %v1013
  %v1034 = vsub.f32 %v963, %v1016
  %v1035 = vsub.f32 %v968, %v1019
  %v1036 = vmul.f32 %v1020, 1.442695
  %v1037 = vpow.pop %v1036
  %v1038 = vmul.f32 %v1021, 1.442695
  %v1039 = vpow.pop %v1038
  %v1040 = vmul.f32 %v1022, 1.442695
  %v1041 = vpow.pop %v1040
  %v1042 = vmul.f32 %v1023, 1.442695
  %v1043 = vpow.pop %v1042
  %v1044 = vmul.f32 %v1024, 1.442695
  %v1045 = vpow.pop %v1044
  %v1046 = vmul.f32 %v1025, 1.442695
  %v1047 = vpow.pop %v1046
  %v1048 = vmul.f32 %v1026, 1.442695
  %v1049 = vpow.pop %v1048
  %v1050 = vmul.f32 %v1027, 1.442695
  %v1051 = vpow.pop %v1050
  %v1052 = vmul.f32 %v1028, 1.442695
  %v1053 = vpow.pop %v1052
  %v1054 = vmul.f32 %v1029, 1.442695
  %v1055 = vpow.pop %v1054
  %v1056 = vmul.f32 %v1030, 1.442695
  %v1057 = vpow.pop %v1056
  %v1058 = vmul.f32 %v1031, 1.442695
  %v1059 = vpow.pop %v1058
  %v1060 = vmul.f32 %v1032, 1.442695
  %v1061 = vpow.pop %v1060
  %v1062 = vmul.f32 %v1033, 1.442695
  %v1063 = vpow.pop %v1062
  %v1064 = vmul.f32 %v1034, 1.442695
  %v1065 = vpow.pop %v1064
  %v1066 = vmul.f32 %v1035, 1.442695
  %v1067 = vpow.pop %v1066
  %v1068 = vsel %vm971, %v1037, 0.0
  %1069 = vadd.xlane.f32.xlu0 %v1068
  %v1070 = vpop.xlane.xlu0 %1069
  %v1071 = vsel %vm971, %v1039, 0.0
  %1072 = vadd.xlane.f32.xlu0 %v1071
  %v1073 = vpop.xlane.xlu0 %1072
  %v1074 = vsel %vm971, %v1041, 0.0
  %1075 = vadd.xlane.f32.xlu0 %v1074
  %v1076 = vpop.xlane.xlu0 %1075
  %v1077 = vsel %vm971, %v1043, 0.0
  %1078 = vadd.xlane.f32.xlu0 %v1077
  %v1079 = vpop.xlane.xlu0 %1078
  %v1080 = vsel %vm971, %v1045, 0.0
  %1081 = vadd.xlane.f32.xlu0 %v1080
  %v1082 = vpop.xlane.xlu0 %1081
  %v1083 = vsel %vm971, %v1047, 0.0
  %1084 = vadd.xlane.f32.xlu0 %v1083
  %v1085 = vpop.xlane.xlu0 %1084
  %v1086 = vsel %vm971, %v1049, 0.0
  %1087 = vadd.xlane.f32.xlu0 %v1086
  %v1088 = vpop.xlane.xlu0 %1087
  %v1089 = vsel %vm971, %v1051, 0.0
  %1090 = vadd.xlane.f32.xlu0 %v1089
  %v1091 = vpop.xlane.xlu0 %1090
  %v1092 = vsel %vm971, %v1053, 0.0
  %1093 = vadd.xlane.f32.xlu0 %v1092
  %v1094 = vpop.xlane.xlu0 %1093
  %v1095 = vsel %vm971, %v1055, 0.0
  %1096 = vadd.xlane.f32.xlu0 %v1095
  %v1097 = vpop.xlane.xlu0 %1096
  %v1098 = vsel %vm971, %v1057, 0.0
  %1099 = vadd.xlane.f32.xlu0 %v1098
  %v1100 = vpop.xlane.xlu0 %1099
  %v1101 = vsel %vm971, %v1059, 0.0
  %1102 = vadd.xlane.f32.xlu0 %v1101
  %v1103 = vpop.xlane.xlu0 %1102
  %v1104 = vsel %vm971, %v1061, 0.0
  %1105 = vadd.xlane.f32.xlu0 %v1104
  %v1106 = vpop.xlane.xlu0 %1105
  %v1107 = vsel %vm971, %v1063, 0.0
  %1108 = vadd.xlane.f32.xlu0 %v1107
  %v1109 = vpop.xlane.xlu0 %1108
  %v1110 = vsel %vm971, %v1065, 0.0
  %1111 = vadd.xlane.f32.xlu0 %v1110
  %v1112 = vpop.xlane.xlu0 %1111
  %v1113 = vsel %vm971, %v1067, 0.0
  %1114 = vadd.xlane.f32.xlu0 %v1113
  %v1115 = vpop.xlane.xlu0 %1114
  %v1116 = vrcp.pop %v1070
  %v1117 = vrcp.pop %v1073
  %v1118 = vrcp.pop %v1076
  %v1119 = vrcp.pop %v1079
  %v1120 = vrcp.pop %v1082
  %v1121 = vrcp.pop %v1085
  %v1122 = vrcp.pop %v1088
  %v1123 = vrcp.pop %v1091
  %v1124 = vrcp.pop %v1094
  %v1125 = vrcp.pop %v1097
  %v1126 = vrcp.pop %v1100
  %v1127 = vrcp.pop %v1103
  %v1128 = vrcp.pop %v1106
  %v1129 = vrcp.pop %v1109
  %v1130 = vrcp.pop %v1112
  %v1131 = vrcp.pop %v1115
  %v1132 = vmul.f32 %v1070, %v1116
  %v1133 = vmul.f32 %v1073, %v1117
  %v1134 = vmul.f32 %v1076, %v1118
  %v1135 = vmul.f32 %v1079, %v1119
  %v1136 = vmul.f32 %v1082, %v1120
  %v1137 = vmul.f32 %v1085, %v1121
  %v1138 = vmul.f32 %v1088, %v1122
  %v1139 = vmul.f32 %v1091, %v1123
  %v1140 = vmul.f32 %v1094, %v1124
  %v1141 = vmul.f32 %v1097, %v1125
  %v1142 = vmul.f32 %v1100, %v1126
  %v1143 = vmul.f32 %v1103, %v1127
  %v1144 = vmul.f32 %v1106, %v1128
  %v1145 = vmul.f32 %v1109, %v1129
  %v1146 = vmul.f32 %v1112, %v1130
  %v1147 = vmul.f32 %v1115, %v1131
  %v1148 = vsub.f32 2.0, %v1132
  %v1149 = vsub.f32 2.0, %v1133
  %v1150 = vsub.f32 2.0, %v1134
  %v1151 = vsub.f32 2.0, %v1135
  %v1152 = vsub.f32 2.0, %v1136
  %v1153 = vsub.f32 2.0, %v1137
  %v1154 = vsub.f32 2.0, %v1138
  %v1155 = vsub.f32 2.0, %v1139
  %v1156 = vsub.f32 2.0, %v1140
  %v1157 = vsub.f32 2.0, %v1141
  %v1158 = vsub.f32 2.0, %v1142
  %v1159 = vsub.f32 2.0, %v1143
  %v1160 = vsub.f32 2.0, %v1144
  %v1161 = vsub.f32 2.0, %v1145
  %v1162 = vsub.f32 2.0, %v1146
  %v1163 = vsub.f32 2.0, %v1147
  %v1164 = vmul.f32 %v1116, %v1148
  %v1165 = vmul.f32 %v1117, %v1149
  %v1166 = vmul.f32 %v1118, %v1150
  %v1167 = vmul.f32 %v1119, %v1151
  %v1168 = vmul.f32 %v1120, %v1152
  %v1169 = vmul.f32 %v1121, %v1153
  %v1170 = vmul.f32 %v1122, %v1154
  %v1171 = vmul.f32 %v1123, %v1155
  %v1172 = vmul.f32 %v1124, %v1156
  %v1173 = vmul.f32 %v1125, %v1157
  %v1174 = vmul.f32 %v1126, %v1158
  %v1175 = vmul.f32 %v1127, %v1159
  %v1176 = vmul.f32 %v1128, %v1160
  %v1177 = vmul.f32 %v1129, %v1161
  %v1178 = vmul.f32 %v1130, %v1162
  %v1179 = vmul.f32 %v1131, %v1163
  %v1180 = vmul.f32 %v1037, %v1164
  %v1181 = vmul.f32 %v1039, %v1165
  %v1182 = vmul.f32 %v1041, %v1166
  %v1183 = vmul.f32 %v1043, %v1167
  %v1184 = vmul.f32 %v1045, %v1168
  %v1185 = vmul.f32 %v1047, %v1169
  %v1186 = vmul.f32 %v1049, %v1170
  %v1187 = vmul.f32 %v1051, %v1171
  %v1188 = vmul.f32 %v1053, %v1172
  %v1189 = vmul.f32 %v1055, %v1173
  %v1190 = vmul.f32 %v1057, %v1174
  %v1191 = vmul.f32 %v1059, %v1175
  %v1192 = vmul.f32 %v1061, %v1176
  %v1193 = vmul.f32 %v1063, %v1177
  %v1194 = vmul.f32 %v1065, %v1178
  %v1195 = vmul.f32 %v1067, %v1179
  %1196 = vrot.lane.b32.xlu0 %v228, 64
  %v1197 = vpop.permute.xlu0 %1196
  %1198 = vrot.lane.b32.xlu0 %v233, 64
  %v1199 = vpop.permute.xlu0 %1198
  %v1203 = vsel %vm971, %v1180, 0
  %v1206 = vsel %vm971, %v1181, 0
  %1208 = vmatprep.subr.mxu0 0.0
  %1209 = vmatpush1.msra.mxu0 %v1197
  %1210 = vmatprep.subr.mxu0 0.0
  %1211 = vmatpush1.msra.mxu0 %v1199
  %1212 = vmatprep.subr.mxu0 0.0
  %1213 = vmatpush1.msra.mxu0 0.0
  %1214 = vmatprep.subr.mxu0 0.0
  %1215 = vmatpush1.msra.mxu0 0.0
  %1216 = vmatprep.subr.mxu0 0.0
  %1217 = vmatpush1.msra.mxu0 0.0
  %1218 = vmatprep.subr.mxu0 0.0
  %1219 = vmatpush1.msra.mxu0 0.0
  %1220 = vmatprep.subr.mxu0 0.0
  %1221 = vmatpush1.msra.mxu0 0.0
  %1222 = vmatprep.subr.mxu0 0.0
  %1223 = vmatpush1.msra.mxu0 0.0
  %1224 = vmatprep.subr.mxu0 0.0
  %1225 = vmatpush1.msra.mxu0 0.0
  %1226 = vmatprep.subr.mxu0 0.0
  %1227 = vmatpush1.msra.mxu0 0.0
  %1228 = vmatprep.subr.mxu0 0.0
  %1229 = vmatpush1.msra.mxu0 0.0
  %1230 = vmatprep.subr.mxu0 0.0
  %1231 = vmatpush1.msra.mxu0 0.0
  %1232 = vmatprep.subr.mxu0 0.0
  %1233 = vmatpush1.msra.mxu0 0.0
  %1234 = vmatprep.subr.mxu0 0.0
  %1235 = vmatpush1.msra.mxu0 0.0
  %1236 = vmatprep.subr.mxu0 0.0
  %1237 = vmatpush1.msra.mxu0 0.0
  %1238 = vmatprep.subr.mxu0 0.0
  %1239 = vmatpush1.msra.mxu0 0.0
  %1240 = vmatprep.subr.mxu0 0.0
  %1241 = vmatpush1.msra.mxu0 0.0
  %1242 = vmatprep.subr.mxu0 0.0
  %1243 = vmatpush1.msra.mxu0 0.0
  %1244 = vmatprep.subr.mxu0 0.0
  %1245 = vmatpush1.msra.mxu0 0.0
  %1246 = vmatprep.subr.mxu0 0.0
  %1247 = vmatpush1.msra.mxu0 0.0
  %1248 = vmatprep.subr.mxu0 0.0
  %1249 = vmatpush1.msra.mxu0 0.0
  %1250 = vmatprep.subr.mxu0 0.0
  %1251 = vmatpush1.msra.mxu0 0.0
  %1252 = vmatprep.subr.mxu0 0.0
  %1253 = vmatpush1.msra.mxu0 0.0
  %1254 = vmatprep.subr.mxu0 0.0
  %1255 = vmatpush1.msra.mxu0 0.0
  %1256 = vmatprep.subr.mxu0 0.0
  %1257 = vmatpush1.msra.mxu0 0.0
  %1258 = vmatprep.subr.mxu0 0.0
  %1259 = vmatpush1.msra.mxu0 0.0
  %1260 = vmatprep.subr.mxu0 0.0
  %1261 = vmatpush1.msra.mxu0 0.0
  %1262 = vmatprep.subr.mxu0 0.0
  %1263 = vmatpush1.msra.mxu0 0.0
  %1264 = vmatprep.subr.mxu0 0.0
  %1265 = vmatpush1.msra.mxu0 0.0
  %1266 = vmatprep.subr.mxu0 0.0
  %1267 = vmatpush1.msra.mxu0 0.0
  %1268 = vmatprep.subr.mxu0 0.0
  %1269 = vmatpush1.msra.mxu0 0.0
  %1270 = vmatprep.subr.mxu0 0.0
  %1271 = vmatpush1.msra.mxu0 0.0
  %1272 = vmatprep.mubr.f32.mxu0 0.0
  %1273 = vmatmul.mubr.f32.gmra.mrb[0].mxu0 %v1203
  %v1274 = vpop.f32.mrb[0].mxu0
  %v1275 = vadd.f32 0.0, %v1274
  %v1276 = vpop.f32.mrb[0].mxu0
  %1277 = vmatprep.mubr.f32.mxu0 0.0
  %1278 = vmatmul.mubr.f32.gmra.mrb[0].mxu0 %v1206
  %v1279 = vpop.f32.mrb[0].mxu0
  %v1280 = vadd.f32 0.0, %v1279
  %v1281 = vpop.f32.mrb[0].mxu0
  %1282 = vdwg.mxu0
  %1283 = vrot.lane.b32.xlu0 %v228, 56
  %v1284 = vpop.permute.xlu0 %1283
  %1285 = vrot.lane.b32.xlu0 %v233, 56
  %v1286 = vpop.permute.xlu0 %1285
  %v1290 = vsel %vm971, %v1182, 0
  %v1293 = vsel %vm971, %v1183, 0
  %1295 = vmatprep.subr.mxu0 0.0
  %1296 = vmatpush1.msra.mxu0 %v1284
  %1297 = vmatprep.subr.mxu0 0.0
  %1298 = vmatpush1.msra.mxu0 %v1286
  %1299 = vmatprep.subr.mxu0 0.0
  %1300 = vmatpush1.msra.mxu0 0.0
  %1301 = vmatprep.subr.mxu0 0.0
  %1302 = vmatpush1.msra.mxu0 0.0
  %1303 = vmatprep.subr.mxu0 0.0
  %1304 = vmatpush1.msra.mxu0 0.0
  %1305 = vmatprep.subr.mxu0 0.0
  %1306 = vmatpush1.msra.mxu0 0.0
  %1307 = vmatprep.subr.mxu0 0.0
  %1308 = vmatpush1.msra.mxu0 0.0
  %1309 = vmatprep.subr.mxu0 0.0
  %1310 = vmatpush1.msra.mxu0 0.0
  %1311 = vmatprep.subr.mxu0 0.0
  %1312 = vmatpush1.msra.mxu0 0.0
  %1313 = vmatprep.subr.mxu0 0.0
  %1314 = vmatpush1.msra.mxu0 0.0
  %1315 = vmatprep.subr.mxu0 0.0
  %1316 = vmatpush1.msra.mxu0 0.0
  %1317 = vmatprep.subr.mxu0 0.0
  %1318 = vmatpush1.msra.mxu0 0.0
  %1319 = vmatprep.subr.mxu0 0.0
  %1320 = vmatpush1.msra.mxu0 0.0
  %1321 = vmatprep.subr.mxu0 0.0
  %1322 = vmatpush1.msra.mxu0 0.0
  %1323 = vmatprep.subr.mxu0 0.0
  %1324 = vmatpush1.msra.mxu0 0.0
  %1325 = vmatprep.subr.mxu0 0.0
  %1326 = vmatpush1.msra.mxu0 0.0
  %1327 = vmatprep.subr.mxu0 0.0
  %1328 = vmatpush1.msra.mxu0 0.0
  %1329 = vmatprep.subr.mxu0 0.0
  %1330 = vmatpush1.msra.mxu0 0.0
  %1331 = vmatprep.subr.mxu0 0.0
  %1332 = vmatpush1.msra.mxu0 0.0
  %1333 = vmatprep.subr.mxu0 0.0
  %1334 = vmatpush1.msra.mxu0 0.0
  %1335 = vmatprep.subr.mxu0 0.0
  %1336 = vmatpush1.msra.mxu0 0.0
  %1337 = vmatprep.subr.mxu0 0.0
  %1338 = vmatpush1.msra.mxu0 0.0
  %1339 = vmatprep.subr.mxu0 0.0
  %1340 = vmatpush1.msra.mxu0 0.0
  %1341 = vmatprep.subr.mxu0 0.0
  %1342 = vmatpush1.msra.mxu0 0.0
  %1343 = vmatprep.subr.mxu0 0.0
  %1344 = vmatpush1.msra.mxu0 0.0
  %1345 = vmatprep.subr.mxu0 0.0
  %1346 = vmatpush1.msra.mxu0 0.0
  %1347 = vmatprep.subr.mxu0 0.0
  %1348 = vmatpush1.msra.mxu0 0.0
  %1349 = vmatprep.subr.mxu0 0.0
  %1350 = vmatpush1.msra.mxu0 0.0
  %1351 = vmatprep.subr.mxu0 0.0
  %1352 = vmatpush1.msra.mxu0 0.0
  %1353 = vmatprep.subr.mxu0 0.0
  %1354 = vmatpush1.msra.mxu0 0.0
  %1355 = vmatprep.subr.mxu0 0.0
  %1356 = vmatpush1.msra.mxu0 0.0
  %1357 = vmatprep.subr.mxu0 0.0
  %1358 = vmatpush1.msra.mxu0 0.0
  %1359 = vmatprep.mubr.f32.mxu0 0.0
  %1360 = vmatmul.mubr.f32.gmra.mrb[0].mxu0 %v1290
  %v1361 = vpop.f32.mrb[0].mxu0
  %v1362 = vadd.f32 0.0, %v1361
  %v1363 = vpop.f32.mrb[0].mxu0
  %1364 = vmatprep.mubr.f32.mxu0 0.0
  %1365 = vmatmul.mubr.f32.gmra.mrb[0].mxu0 %v1293
  %v1366 = vpop.f32.mrb[0].mxu0
  %v1367 = vadd.f32 0.0, %v1366
  %v1368 = vpop.f32.mrb[0].mxu0
  %1369 = vdwg.mxu0
  %1370 = vrot.lane.b32.xlu0 %v228, 48
  %v1371 = vpop.permute.xlu0 %1370
  %1372 = vrot.lane.b32.xlu0 %v233, 48
  %v1373 = vpop.permute.xlu0 %1372
  %v1377 = vsel %vm971, %v1184, 0
  %v1380 = vsel %vm971, %v1185, 0
  %1382 = vmatprep.subr.mxu0 0.0
  %1383 = vmatpush1.msra.mxu0 %v1371
  %1384 = vmatprep.subr.mxu0 0.0
  %1385 = vmatpush1.msra.mxu0 %v1373
  %1386 = vmatprep.subr.mxu0 0.0
  %1387 = vmatpush1.msra.mxu0 0.0
  %1388 = vmatprep.subr.mxu0 0.0
  %1389 = vmatpush1.msra.mxu0 0.0
  %1390 = vmatprep.subr.mxu0 0.0
  %1391 = vmatpush1.msra.mxu0 0.0
  %1392 = vmatprep.subr.mxu0 0.0
  %1393 = vmatpush1.msra.mxu0 0.0
  %1394 = vmatprep.subr.mxu0 0.0
  %1395 = vmatpush1.msra.mxu0 0.0
  %1396 = vmatprep.subr.mxu0 0.0
  %1397 = vmatpush1.msra.mxu0 0.0
  %1398 = vmatprep.subr.mxu0 0.0
  %1399 = vmatpush1.msra.mxu0 0.0
  %1400 = vmatprep.subr.mxu0 0.0
  %1401 = vmatpush1.msra.mxu0 0.0
  %1402 = vmatprep.subr.mxu0 0.0
  %1403 = vmatpush1.msra.mxu0 0.0
  %1404 = vmatprep.subr.mxu0 0.0
  %1405 = vmatpush1.msra.mxu0 0.0
  %1406 = vmatprep.subr.mxu0 0.0
  %1407 = vmatpush1.msra.mxu0 0.0
  %1408 = vmatprep.subr.mxu0 0.0
  %1409 = vmatpush1.msra.mxu0 0.0
  %1410 = vmatprep.subr.mxu0 0.0
  %1411 = vmatpush1.msra.mxu0 0.0
  %1412 = vmatprep.subr.mxu0 0.0
  %1413 = vmatpush1.msra.mxu0 0.0
  %1414 = vmatprep.subr.mxu0 0.0
  %1415 = vmatpush1.msra.mxu0 0.0
  %1416 = vmatprep.subr.mxu0 0.0
  %1417 = vmatpush1.msra.mxu0 0.0
  %1418 = vmatprep.subr.mxu0 0.0
  %1419 = vmatpush1.msra.mxu0 0.0
  %1420 = vmatprep.subr.mxu0 0.0
  %1421 = vmatpush1.msra.mxu0 0.0
  %1422 = vmatprep.subr.mxu0 0.0
  %1423 = vmatpush1.msra.mxu0 0.0
  %1424 = vmatprep.subr.mxu0 0.0
  %1425 = vmatpush1.msra.mxu0 0.0
  %1426 = vmatprep.subr.mxu0 0.0
  %1427 = vmatpush1.msra.mxu0 0.0
  %1428 = vmatprep.subr.mxu0 0.0
  %1429 = vmatpush1.msra.mxu0 0.0
  %1430 = vmatprep.subr.mxu0 0.0
  %1431 = vmatpush1.msra.mxu0 0.0
  %1432 = vmatprep.subr.mxu0 0.0
  %1433 = vmatpush1.msra.mxu0 0.0
  %1434 = vmatprep.subr.mxu0 0.0
  %1435 = vmatpush1.msra.mxu0 0.0
  %1436 = vmatprep.subr.mxu0 0.0
  %1437 = vmatpush1.msra.mxu0 0.0
  %1438 = vmatprep.subr.mxu0 0.0
  %1439 = vmatpush1.msra.mxu0 0.0
  %1440 = vmatprep.subr.mxu0 0.0
  %1441 = vmatpush1.msra.mxu0 0.0
  %1442 = vmatprep.subr.mxu0 0.0
  %1443 = vmatpush1.msra.mxu0 0.0
  %1444 = vmatprep.subr.mxu0 0.0
  %1445 = vmatpush1.msra.mxu0 0.0
  %1446 = vmatprep.mubr.f32.mxu0 0.0
  %1447 = vmatmul.mubr.f32.gmra.mrb[0].mxu0 %v1377
  %v1448 = vpop.f32.mrb[0].mxu0
  %v1449 = vadd.f32 0.0, %v1448
  %v1450 = vpop.f32.mrb[0].mxu0
  %1451 = vmatprep.mubr.f32.mxu0 0.0
  %1452 = vmatmul.mubr.f32.gmra.mrb[0].mxu0 %v1380
  %v1453 = vpop.f32.mrb[0].mxu0
  %v1454 = vadd.f32 0.0, %v1453
  %v1455 = vpop.f32.mrb[0].mxu0
  %1456 = vdwg.mxu0
  %1457 = vrot.lane.b32.xlu0 %v228, 40
  %v1458 = vpop.permute.xlu0 %1457
  %1459 = vrot.lane.b32.xlu0 %v233, 40
  %v1460 = vpop.permute.xlu0 %1459
  %v1464 = vsel %vm971, %v1186, 0
  %v1467 = vsel %vm971, %v1187, 0
  %1469 = vmatprep.subr.mxu0 0.0
  %1470 = vmatpush1.msra.mxu0 %v1458
  %1471 = vmatprep.subr.mxu0 0.0
  %1472 = vmatpush1.msra.mxu0 %v1460
  %1473 = vmatprep.subr.mxu0 0.0
  %1474 = vmatpush1.msra.mxu0 0.0
  %1475 = vmatprep.subr.mxu0 0.0
  %1476 = vmatpush1.msra.mxu0 0.0
  %1477 = vmatprep.subr.mxu0 0.0
  %1478 = vmatpush1.msra.mxu0 0.0
  %1479 = vmatprep.subr.mxu0 0.0
  %1480 = vmatpush1.msra.mxu0 0.0
  %1481 = vmatprep.subr.mxu0 0.0
  %1482 = vmatpush1.msra.mxu0 0.0
  %1483 = vmatprep.subr.mxu0 0.0
  %1484 = vmatpush1.msra.mxu0 0.0
  %1485 = vmatprep.subr.mxu0 0.0
  %1486 = vmatpush1.msra.mxu0 0.0
  %1487 = vmatprep.subr.mxu0 0.0
  %1488 = vmatpush1.msra.mxu0 0.0
  %1489 = vmatprep.subr.mxu0 0.0
  %1490 = vmatpush1.msra.mxu0 0.0
  %1491 = vmatprep.subr.mxu0 0.0
  %1492 = vmatpush1.msra.mxu0 0.0
  %1493 = vmatprep.subr.mxu0 0.0
  %1494 = vmatpush1.msra.mxu0 0.0
  %1495 = vmatprep.subr.mxu0 0.0
  %1496 = vmatpush1.msra.mxu0 0.0
  %1497 = vmatprep.subr.mxu0 0.0
  %1498 = vmatpush1.msra.mxu0 0.0
  %1499 = vmatprep.subr.mxu0 0.0
  %1500 = vmatpush1.msra.mxu0 0.0
  %1501 = vmatprep.subr.mxu0 0.0
  %1502 = vmatpush1.msra.mxu0 0.0
  %1503 = vmatprep.subr.mxu0 0.0
  %1504 = vmatpush1.msra.mxu0 0.0
  %1505 = vmatprep.subr.mxu0 0.0
  %1506 = vmatpush1.msra.mxu0 0.0
  %1507 = vmatprep.subr.mxu0 0.0
  %1508 = vmatpush1.msra.mxu0 0.0
  %1509 = vmatprep.subr.mxu0 0.0
  %1510 = vmatpush1.msra.mxu0 0.0
  %1511 = vmatprep.subr.mxu0 0.0
  %1512 = vmatpush1.msra.mxu0 0.0
  %1513 = vmatprep.subr.mxu0 0.0
  %1514 = vmatpush1.msra.mxu0 0.0
  %1515 = vmatprep.subr.mxu0 0.0
  %1516 = vmatpush1.msra.mxu0 0.0
  %1517 = vmatprep.subr.mxu0 0.0
  %1518 = vmatpush1.msra.mxu0 0.0
  %1519 = vmatprep.subr.mxu0 0.0
  %1520 = vmatpush1.msra.mxu0 0.0
  %1521 = vmatprep.subr.mxu0 0.0
  %1522 = vmatpush1.msra.mxu0 0.0
  %1523 = vmatprep.subr.mxu0 0.0
  %1524 = vmatpush1.msra.mxu0 0.0
  %1525 = vmatprep.subr.mxu0 0.0
  %1526 = vmatpush1.msra.mxu0 0.0
  %1527 = vmatprep.subr.mxu0 0.0
  %1528 = vmatpush1.msra.mxu0 0.0
  %1529 = vmatprep.subr.mxu0 0.0
  %1530 = vmatpush1.msra.mxu0 0.0
  %1531 = vmatprep.subr.mxu0 0.0
  %1532 = vmatpush1.msra.mxu0 0.0
  %1533 = vmatprep.mubr.f32.mxu0 0.0
  %1534 = vmatmul.mubr.f32.gmra.mrb[0].mxu0 %v1464
  %v1535 = vpop.f32.mrb[0].mxu0
  %v1536 = vadd.f32 0.0, %v1535
  %v1537 = vpop.f32.mrb[0].mxu0
  %1538 = vmatprep.mubr.f32.mxu0 0.0
  %1539 = vmatmul.mubr.f32.gmra.mrb[0].mxu0 %v1467
  %v1540 = vpop.f32.mrb[0].mxu0
  %v1541 = vadd.f32 0.0, %v1540
  %v1542 = vpop.f32.mrb[0].mxu0
  %1543 = vdwg.mxu0
  %1546 = vrot.lane.b32.xlu0 %v1362, 8
  %v1547 = vpop.permute.xlu0 %1546
  %1548 = vrot.lane.b32.xlu0 %v1367, 8
  %v1549 = vpop.permute.xlu0 %1548
  %1554 = vrot.lane.b32.xlu0 %v1449, 16
  %v1555 = vpop.permute.xlu0 %1554
  %1556 = vrot.lane.b32.xlu0 %v1454, 16
  %v1557 = vpop.permute.xlu0 %1556
  %1562 = vrot.lane.b32.xlu0 %v1536, 24
  %v1563 = vpop.permute.xlu0 %1562
  %1564 = vrot.lane.b32.xlu0 %v1541, 24
  %v1565 = vpop.permute.xlu0 %1564
  %v1568 = vsel %vm252, %v1275, %v1547
  %v1569 = vsel %vm252, %v1280, %v1549
  %v1570 = vsel %vm971, %v1568, %v1555
  %v1571 = vsel %vm971, %v1569, %v1557
  %vm1572 = vcmask 195584
  %v1573 = vsel %vm1572, %v1570, %v1563
  %v1574 = vsel %vm1572, %v1571, %v1565
  %1575 = vrot.lane.b32.xlu0 %v238, 64
  %v1576 = vpop.permute.xlu0 %1575
  %1577 = vrot.lane.b32.xlu0 %v243, 64
  %v1578 = vpop.permute.xlu0 %1577
  %v1582 = vsel %vm971, %v1188, 0
  %v1585 = vsel %vm971, %v1189, 0
  %1587 = vmatprep.subr.mxu0 0.0
  %1588 = vmatpush1.msra.mxu0 %v1576
  %1589 = vmatprep.subr.mxu0 0.0
  %1590 = vmatpush1.msra.mxu0 %v1578
  %1591 = vmatprep.subr.mxu0 0.0
  %1592 = vmatpush1.msra.mxu0 0.0
  %1593 = vmatprep.subr.mxu0 0.0
  %1594 = vmatpush1.msra.mxu0 0.0
  %1595 = vmatprep.subr.mxu0 0.0
  %1596 = vmatpush1.msra.mxu0 0.0
  %1597 = vmatprep.subr.mxu0 0.0
  %1598 = vmatpush1.msra.mxu0 0.0
  %1599 = vmatprep.subr.mxu0 0.0
  %1600 = vmatpush1.msra.mxu0 0.0
  %1601 = vmatprep.subr.mxu0 0.0
  %1602 = vmatpush1.msra.mxu0 0.0
  %1603 = vmatprep.subr.mxu0 0.0
  %1604 = vmatpush1.msra.mxu0 0.0
  %1605 = vmatprep.subr.mxu0 0.0
  %1606 = vmatpush1.msra.mxu0 0.0
  %1607 = vmatprep.subr.mxu0 0.0
  %1608 = vmatpush1.msra.mxu0 0.0
  %1609 = vmatprep.subr.mxu0 0.0
  %1610 = vmatpush1.msra.mxu0 0.0
  %1611 = vmatprep.subr.mxu0 0.0
  %1612 = vmatpush1.msra.mxu0 0.0
  %1613 = vmatprep.subr.mxu0 0.0
  %1614 = vmatpush1.msra.mxu0 0.0
  %1615 = vmatprep.subr.mxu0 0.0
  %1616 = vmatpush1.msra.mxu0 0.0
  %1617 = vmatprep.subr.mxu0 0.0
  %1618 = vmatpush1.msra.mxu0 0.0
  %1619 = vmatprep.subr.mxu0 0.0
  %1620 = vmatpush1.msra.mxu0 0.0
  %1621 = vmatprep.subr.mxu0 0.0
  %1622 = vmatpush1.msra.mxu0 0.0
  %1623 = vmatprep.subr.mxu0 0.0
  %1624 = vmatpush1.msra.mxu0 0.0
  %1625 = vmatprep.subr.mxu0 0.0
  %1626 = vmatpush1.msra.mxu0 0.0
  %1627 = vmatprep.subr.mxu0 0.0
  %1628 = vmatpush1.msra.mxu0 0.0
  %1629 = vmatprep.subr.mxu0 0.0
  %1630 = vmatpush1.msra.mxu0 0.0
  %1631 = vmatprep.subr.mxu0 0.0
  %1632 = vmatpush1.msra.mxu0 0.0
  %1633 = vmatprep.subr.mxu0 0.0
  %1634 = vmatpush1.msra.mxu0 0.0
  %1635 = vmatprep.subr.mxu0 0.0
  %1636 = vmatpush1.msra.mxu0 0.0
  %1637 = vmatprep.subr.mxu0 0.0
  %1638 = vmatpush1.msra.mxu0 0.0
  %1639 = vmatprep.subr.mxu0 0.0
  %1640 = vmatpush1.msra.mxu0 0.0
  %1641 = vmatprep.subr.mxu0 0.0
  %1642 = vmatpush1.msra.mxu0 0.0
  %1643 = vmatprep.subr.mxu0 0.0
  %1644 = vmatpush1.msra.mxu0 0.0
  %1645 = vmatprep.subr.mxu0 0.0
  %1646 = vmatpush1.msra.mxu0 0.0
  %1647 = vmatprep.subr.mxu0 0.0
  %1648 = vmatpush1.msra.mxu0 0.0
  %1649 = vmatprep.subr.mxu0 0.0
  %1650 = vmatpush1.msra.mxu0 0.0
  %1651 = vmatprep.mubr.f32.mxu0 0.0
  %1652 = vmatmul.mubr.f32.gmra.mrb[0].mxu0 %v1582
  %v1653 = vpop.f32.mrb[0].mxu0
  %v1654 = vadd.f32 0.0, %v1653
  %v1655 = vpop.f32.mrb[0].mxu0
  %1656 = vmatprep.mubr.f32.mxu0 0.0
  %1657 = vmatmul.mubr.f32.gmra.mrb[0].mxu0 %v1585
  %v1658 = vpop.f32.mrb[0].mxu0
  %v1659 = vadd.f32 0.0, %v1658
  %v1660 = vpop.f32.mrb[0].mxu0
  %1661 = vdwg.mxu0
  %1662 = vrot.lane.b32.xlu0 %v238, 56
  %v1663 = vpop.permute.xlu0 %1662
  %1664 = vrot.lane.b32.xlu0 %v243, 56
  %v1665 = vpop.permute.xlu0 %1664
  %v1669 = vsel %vm971, %v1190, 0
  %v1672 = vsel %vm971, %v1191, 0
  %1674 = vmatprep.subr.mxu0 0.0
  %1675 = vmatpush1.msra.mxu0 %v1663
  %1676 = vmatprep.subr.mxu0 0.0
  %1677 = vmatpush1.msra.mxu0 %v1665
  %1678 = vmatprep.subr.mxu0 0.0
  %1679 = vmatpush1.msra.mxu0 0.0
  %1680 = vmatprep.subr.mxu0 0.0
  %1681 = vmatpush1.msra.mxu0 0.0
  %1682 = vmatprep.subr.mxu0 0.0
  %1683 = vmatpush1.msra.mxu0 0.0
  %1684 = vmatprep.subr.mxu0 0.0
  %1685 = vmatpush1.msra.mxu0 0.0
  %1686 = vmatprep.subr.mxu0 0.0
  %1687 = vmatpush1.msra.mxu0 0.0
  %1688 = vmatprep.subr.mxu0 0.0
  %1689 = vmatpush1.msra.mxu0 0.0
  %1690 = vmatprep.subr.mxu0 0.0
  %1691 = vmatpush1.msra.mxu0 0.0
  %1692 = vmatprep.subr.mxu0 0.0
  %1693 = vmatpush1.msra.mxu0 0.0
  %1694 = vmatprep.subr.mxu0 0.0
  %1695 = vmatpush1.msra.mxu0 0.0
  %1696 = vmatprep.subr.mxu0 0.0
  %1697 = vmatpush1.msra.mxu0 0.0
  %1698 = vmatprep.subr.mxu0 0.0
  %1699 = vmatpush1.msra.mxu0 0.0
  %1700 = vmatprep.subr.mxu0 0.0
  %1701 = vmatpush1.msra.mxu0 0.0
  %1702 = vmatprep.subr.mxu0 0.0
  %1703 = vmatpush1.msra.mxu0 0.0
  %1704 = vmatprep.subr.mxu0 0.0
  %1705 = vmatpush1.msra.mxu0 0.0
  %1706 = vmatprep.subr.mxu0 0.0
  %1707 = vmatpush1.msra.mxu0 0.0
  %1708 = vmatprep.subr.mxu0 0.0
  %1709 = vmatpush1.msra.mxu0 0.0
  %1710 = vmatprep.subr.mxu0 0.0
  %1711 = vmatpush1.msra.mxu0 0.0
  %1712 = vmatprep.subr.mxu0 0.0
  %1713 = vmatpush1.msra.mxu0 0.0
  %1714 = vmatprep.subr.mxu0 0.0
  %1715 = vmatpush1.msra.mxu0 0.0
  %1716 = vmatprep.subr.mxu0 0.0
  %1717 = vmatpush1.msra.mxu0 0.0
  %1718 = vmatprep.subr.mxu0 0.0
  %1719 = vmatpush1.msra.mxu0 0.0
  %1720 = vmatprep.subr.mxu0 0.0
  %1721 = vmatpush1.msra.mxu0 0.0
  %1722 = vmatprep.subr.mxu0 0.0
  %1723 = vmatpush1.msra.mxu0 0.0
  %1724 = vmatprep.subr.mxu0 0.0
  %1725 = vmatpush1.msra.mxu0 0.0
  %1726 = vmatprep.subr.mxu0 0.0
  %1727 = vmatpush1.msra.mxu0 0.0
  %1728 = vmatprep.subr.mxu0 0.0
  %1729 = vmatpush1.msra.mxu0 0.0
  %1730 = vmatprep.subr.mxu0 0.0
  %1731 = vmatpush1.msra.mxu0 0.0
  %1732 = vmatprep.subr.mxu0 0.0
  %1733 = vmatpush1.msra.mxu0 0.0
  %1734 = vmatprep.subr.mxu0 0.0
  %1735 = vmatpush1.msra.mxu0 0.0
  %1736 = vmatprep.subr.mxu0 0.0
  %1737 = vmatpush1.msra.mxu0 0.0
  %1738 = vmatprep.mubr.f32.mxu0 0.0
  %1739 = vmatmul.mubr.f32.gmra.mrb[0].mxu0 %v1669
  %v1740 = vpop.f32.mrb[0].mxu0
  %v1741 = vadd.f32 0.0, %v1740
  %v1742 = vpop.f32.mrb[0].mxu0
  %1743 = vmatprep.mubr.f32.mxu0 0.0
  %1744 = vmatmul.mubr.f32.gmra.mrb[0].mxu0 %v1672
  %v1745 = vpop.f32.mrb[0].mxu0
  %v1746 = vadd.f32 0.0, %v1745
  %v1747 = vpop.f32.mrb[0].mxu0
  %1748 = vdwg.mxu0
  %1749 = vrot.lane.b32.xlu0 %v238, 48
  %v1750 = vpop.permute.xlu0 %1749
  %1751 = vrot.lane.b32.xlu0 %v243, 48
  %v1752 = vpop.permute.xlu0 %1751
  %v1756 = vsel %vm971, %v1192, 0
  %v1759 = vsel %vm971, %v1193, 0
  %1761 = vmatprep.subr.mxu0 0.0
  %1762 = vmatpush1.msra.mxu0 %v1750
  %1763 = vmatprep.subr.mxu0 0.0
  %1764 = vmatpush1.msra.mxu0 %v1752
  %1765 = vmatprep.subr.mxu0 0.0
  %1766 = vmatpush1.msra.mxu0 0.0
  %1767 = vmatprep.subr.mxu0 0.0
  %1768 = vmatpush1.msra.mxu0 0.0
  %1769 = vmatprep.subr.mxu0 0.0
  %1770 = vmatpush1.msra.mxu0 0.0
  %1771 = vmatprep.subr.mxu0 0.0
  %1772 = vmatpush1.msra.mxu0 0.0
  %1773 = vmatprep.subr.mxu0 0.0
  %1774 = vmatpush1.msra.mxu0 0.0
  %1775 = vmatprep.subr.mxu0 0.0
  %1776 = vmatpush1.msra.mxu0 0.0
  %1777 = vmatprep.subr.mxu0 0.0
  %1778 = vmatpush1.msra.mxu0 0.0
  %1779 = vmatprep.subr.mxu0 0.0
  %1780 = vmatpush1.msra.mxu0 0.0
  %1781 = vmatprep.subr.mxu0 0.0
  %1782 = vmatpush1.msra.mxu0 0.0
  %1783 = vmatprep.subr.mxu0 0.0
  %1784 = vmatpush1.msra.mxu0 0.0
  %1785 = vmatprep.subr.mxu0 0.0
  %1786 = vmatpush1.msra.mxu0 0.0
  %1787 = vmatprep.subr.mxu0 0.0
  %1788 = vmatpush1.msra.mxu0 0.0
  %1789 = vmatprep.subr.mxu0 0.0
  %1790 = vmatpush1.msra.mxu0 0.0
  %1791 = vmatprep.subr.mxu0 0.0
  %1792 = vmatpush1.msra.mxu0 0.0
  %1793 = vmatprep.subr.mxu0 0.0
  %1794 = vmatpush1.msra.mxu0 0.0
  %1795 = vmatprep.subr.mxu0 0.0
  %1796 = vmatpush1.msra.mxu0 0.0
  %1797 = vmatprep.subr.mxu0 0.0
  %1798 = vmatpush1.msra.mxu0 0.0
  %1799 = vmatprep.subr.mxu0 0.0
  %1800 = vmatpush1.msra.mxu0 0.0
  %1801 = vmatprep.subr.mxu0 0.0
  %1802 = vmatpush1.msra.mxu0 0.0
  %1803 = vmatprep.subr.mxu0 0.0
  %1804 = vmatpush1.msra.mxu0 0.0
  %1805 = vmatprep.subr.mxu0 0.0
  %1806 = vmatpush1.msra.mxu0 0.0
  %1807 = vmatprep.subr.mxu0 0.0
  %1808 = vmatpush1.msra.mxu0 0.0
  %1809 = vmatprep.subr.mxu0 0.0
  %1810 = vmatpush1.msra.mxu0 0.0
  %1811 = vmatprep.subr.mxu0 0.0
  %1812 = vmatpush1.msra.mxu0 0.0
  %1813 = vmatprep.subr.mxu0 0.0
  %1814 = vmatpush1.msra.mxu0 0.0
  %1815 = vmatprep.subr.mxu0 0.0
  %1816 = vmatpush1.msra.mxu0 0.0
  %1817 = vmatprep.subr.mxu0 0.0
  %1818 = vmatpush1.msra.mxu0 0.0
  %1819 = vmatprep.subr.mxu0 0.0
  %1820 = vmatpush1.msra.mxu0 0.0
  %1821 = vmatprep.subr.mxu0 0.0
  %1822 = vmatpush1.msra.mxu0 0.0
  %1823 = vmatprep.subr.mxu0 0.0
  %1824 = vmatpush1.msra.mxu0 0.0
  %1825 = vmatprep.mubr.f32.mxu0 0.0
  %1826 = vmatmul.mubr.f32.gmra.mrb[0].mxu0 %v1756
  %v1827 = vpop.f32.mrb[0].mxu0
  %v1828 = vadd.f32 0.0, %v1827
  %v1829 = vpop.f32.mrb[0].mxu0
  %1830 = vmatprep.mubr.f32.mxu0 0.0
  %1831 = vmatmul.mubr.f32.gmra.mrb[0].mxu0 %v1759
  %v1832 = vpop.f32.mrb[0].mxu0
  %v1833 = vadd.f32 0.0, %v1832
  %v1834 = vpop.f32.mrb[0].mxu0
  %1835 = vdwg.mxu0
  %1836 = vrot.lane.b32.xlu0 %v238, 40
  %v1837 = vpop.permute.xlu0 %1836
  %1838 = vrot.lane.b32.xlu0 %v243, 40
  %v1839 = vpop.permute.xlu0 %1838
  %v1843 = vsel %vm971, %v1194, 0
  %v1846 = vsel %vm971, %v1195, 0
  %1848 = vmatprep.subr.mxu0 0.0
  %1849 = vmatpush1.msra.mxu0 %v1837
  %1850 = vmatprep.subr.mxu0 0.0
  %1851 = vmatpush1.msra.mxu0 %v1839
  %1852 = vmatprep.subr.mxu0 0.0
  %1853 = vmatpush1.msra.mxu0 0.0
  %1854 = vmatprep.subr.mxu0 0.0
  %1855 = vmatpush1.msra.mxu0 0.0
  %1856 = vmatprep.subr.mxu0 0.0
  %1857 = vmatpush1.msra.mxu0 0.0
  %1858 = vmatprep.subr.mxu0 0.0
  %1859 = vmatpush1.msra.mxu0 0.0
  %1860 = vmatprep.subr.mxu0 0.0
  %1861 = vmatpush1.msra.mxu0 0.0
  %1862 = vmatprep.subr.mxu0 0.0
  %1863 = vmatpush1.msra.mxu0 0.0
  %1864 = vmatprep.subr.mxu0 0.0
  %1865 = vmatpush1.msra.mxu0 0.0
  %1866 = vmatprep.subr.mxu0 0.0
  %1867 = vmatpush1.msra.mxu0 0.0
  %1868 = vmatprep.subr.mxu0 0.0
  %1869 = vmatpush1.msra.mxu0 0.0
  %1870 = vmatprep.subr.mxu0 0.0
  %1871 = vmatpush1.msra.mxu0 0.0
  %1872 = vmatprep.subr.mxu0 0.0
  %1873 = vmatpush1.msra.mxu0 0.0
  %1874 = vmatprep.subr.mxu0 0.0
  %1875 = vmatpush1.msra.mxu0 0.0
  %1876 = vmatprep.subr.mxu0 0.0
  %1877 = vmatpush1.msra.mxu0 0.0
  %1878 = vmatprep.subr.mxu0 0.0
  %1879 = vmatpush1.msra.mxu0 0.0
  %1880 = vmatprep.subr.mxu0 0.0
  %1881 = vmatpush1.msra.mxu0 0.0
  %1882 = vmatprep.subr.mxu0 0.0
  %1883 = vmatpush1.msra.mxu0 0.0
  %1884 = vmatprep.subr.mxu0 0.0
  %1885 = vmatpush1.msra.mxu0 0.0
  %1886 = vmatprep.subr.mxu0 0.0
  %1887 = vmatpush1.msra.mxu0 0.0
  %1888 = vmatprep.subr.mxu0 0.0
  %1889 = vmatpush1.msra.mxu0 0.0
  %1890 = vmatprep.subr.mxu0 0.0
  %1891 = vmatpush1.msra.mxu0 0.0
  %1892 = vmatprep.subr.mxu0 0.0
  %1893 = vmatpush1.msra.mxu0 0.0
  %1894 = vmatprep.subr.mxu0 0.0
  %1895 = vmatpush1.msra.mxu0 0.0
  %1896 = vmatprep.subr.mxu0 0.0
  %1897 = vmatpush1.msra.mxu0 0.0
  %1898 = vmatprep.subr.mxu0 0.0
  %1899 = vmatpush1.msra.mxu0 0.0
  %1900 = vmatprep.subr.mxu0 0.0
  %1901 = vmatpush1.msra.mxu0 0.0
  %1902 = vmatprep.subr.mxu0 0.0
  %1903 = vmatpush1.msra.mxu0 0.0
  %1904 = vmatprep.subr.mxu0 0.0
  %1905 = vmatpush1.msra.mxu0 0.0
  %1906 = vmatprep.subr.mxu0 0.0
  %1907 = vmatpush1.msra.mxu0 0.0
  %1908 = vmatprep.subr.mxu0 0.0
  %1909 = vmatpush1.msra.mxu0 0.0
  %1910 = vmatprep.subr.mxu0 0.0
  %1911 = vmatpush1.msra.mxu0 0.0
  %1912 = vmatprep.mubr.f32.mxu0 0.0
  %1913 = vmatmul.mubr.f32.gmra.mrb[0].mxu0 %v1843
  %v1914 = vpop.f32.mrb[0].mxu0
  %v1915 = vadd.f32 0.0, %v1914
  %v1916 = vpop.f32.mrb[0].mxu0
  %1917 = vmatprep.mubr.f32.mxu0 0.0
  %1918 = vmatmul.mubr.f32.gmra.mrb[0].mxu0 %v1846
  %v1919 = vpop.f32.mrb[0].mxu0
  %v1920 = vadd.f32 0.0, %v1919
  %v1921 = vpop.f32.mrb[0].mxu0
  %1922 = vdwg.mxu0
  %1925 = vrot.lane.b32.xlu0 %v1741, 8
  %v1926 = vpop.permute.xlu0 %1925
  %1927 = vrot.lane.b32.xlu0 %v1746, 8
  %v1928 = vpop.permute.xlu0 %1927
  %1933 = vrot.lane.b32.xlu0 %v1828, 16
  %v1934 = vpop.permute.xlu0 %1933
  %1935 = vrot.lane.b32.xlu0 %v1833, 16
  %v1936 = vpop.permute.xlu0 %1935
  %1941 = vrot.lane.b32.xlu0 %v1915, 24
  %v1942 = vpop.permute.xlu0 %1941
  %1943 = vrot.lane.b32.xlu0 %v1920, 24
  %v1944 = vpop.permute.xlu0 %1943
  %v1947 = vsel %vm252, %v1654, %v1926
  %v1948 = vsel %vm252, %v1659, %v1928
  %v1949 = vsel %vm971, %v1947, %v1934
  %v1950 = vsel %vm971, %v1948, %v1936
  %v1951 = vsel %vm1572, %v1949, %v1942
  %v1952 = vsel %vm1572, %v1950, %v1944
  %v1953 = vld [vmem:[%s6] sm:$0xff]
  %v1954 = vld [vmem:[%s6 + $0x8] sm:$0xff]
  %v1955 = vld [vmem:[%s6 + $0x10] sm:$0xff]
  %v1956 = vld [vmem:[%s6 + $0x18] sm:$0xff]
  %v1957 = vld [vmem:[%s7] sm:$0x1]
  %v1959 = vlaneseq
  %v1960 = vshrl.u32 %v1959, 7
  %v1961 = vsub.s32 0, %v1960
  %v1962 = vrot.slane %v1957, %v1961
  %v1965 = vsel %vm148, %v1573, 0
  %v1968 = vsel %vm148, %v1574, 0
  %v1971 = vsel %vm148, %v1951, 0
  %v1974 = vsel %vm148, %v1952, 0
  %1976 = vmatprep.subr.mxu0 0.0
  %1977 = vmatpush1.msra.mxu0 %v1953
  %1978 = vmatprep.subr.mxu0 0.0
  %1979 = vmatpush1.msra.mxu0 %v1954
  %1980 = vmatprep.subr.mxu0 0.0
  %1981 = vmatpush1.msra.mxu0 %v1955
  %1982 = vmatprep.subr.mxu0 0.0
  %1983 = vmatpush1.msra.mxu0 %v1956
  %1984 = vmatprep.subr.mxu0 0.0
  %1985 = vmatpush1.msra.mxu0 0.0
  %1986 = vmatprep.subr.mxu0 0.0
  %1987 = vmatpush1.msra.mxu0 0.0
  %1988 = vmatprep.subr.mxu0 0.0
  %1989 = vmatpush1.msra.mxu0 0.0
  %1990 = vmatprep.subr.mxu0 0.0
  %1991 = vmatpush1.msra.mxu0 0.0
  %1992 = vmatprep.subr.mxu0 0.0
  %1993 = vmatpush1.msra.mxu0 0.0
  %1994 = vmatprep.subr.mxu0 0.0
  %1995 = vmatpush1.msra.mxu0 0.0
  %1996 = vmatprep.subr.mxu0 0.0
  %1997 = vmatpush1.msra.mxu0 0.0
  %1998 = vmatprep.subr.mxu0 0.0
  %1999 = vmatpush1.msra.mxu0 0.0
  %2000 = vmatprep.subr.mxu0 0.0
  %2001 = vmatpush1.msra.mxu0 0.0
  %2002 = vmatprep.subr.mxu0 0.0
  %2003 = vmatpush1.msra.mxu0 0.0
  %2004 = vmatprep.subr.mxu0 0.0
  %2005 = vmatpush1.msra.mxu0 0.0
  %2006 = vmatprep.subr.mxu0 0.0
  %2007 = vmatpush1.msra.mxu0 0.0
  %2008 = vmatprep.subr.mxu0 0.0
  %2009 = vmatpush1.msra.mxu0 0.0
  %2010 = vmatprep.subr.mxu0 0.0
  %2011 = vmatpush1.msra.mxu0 0.0
  %2012 = vmatprep.subr.mxu0 0.0
  %2013 = vmatpush1.msra.mxu0 0.0
  %2014 = vmatprep.subr.mxu0 0.0
  %2015 = vmatpush1.msra.mxu0 0.0
  %2016 = vmatprep.subr.mxu0 0.0
  %2017 = vmatpush1.msra.mxu0 0.0
  %2018 = vmatprep.subr.mxu0 0.0
  %2019 = vmatpush1.msra.mxu0 0.0
  %2020 = vmatprep.subr.mxu0 0.0
  %2021 = vmatpush1.msra.mxu0 0.0
  %2022 = vmatprep.subr.mxu0 0.0
  %2023 = vmatpush1.msra.mxu0 0.0
  %2024 = vmatprep.subr.mxu0 0.0
  %2025 = vmatpush1.msra.mxu0 0.0
  %2026 = vmatprep.subr.mxu0 0.0
  %2027 = vmatpush1.msra.mxu0 0.0
  %2028 = vmatprep.subr.mxu0 0.0
  %2029 = vmatpush1.msra.mxu0 0.0
  %2030 = vmatprep.subr.mxu0 0.0
  %2031 = vmatpush1.msra.mxu0 0.0
  %2032 = vmatprep.subr.mxu0 0.0
  %2033 = vmatpush1.msra.mxu0 0.0
  %2034 = vmatprep.subr.mxu0 0.0
  %2035 = vmatpush1.msra.mxu0 0.0
  %2036 = vmatprep.subr.mxu0 0.0
  %2037 = vmatpush1.msra.mxu0 0.0
  %2038 = vmatprep.subr.mxu0 0.0
  %2039 = vmatpush1.msra.mxu0 0.0
  %2040 = vmatprep.mubr.f32.mxu0 0.0
  %2041 = vmatmul.mubr.f32.gmra.mrb[0].mxu0 %v1965
  %v2042 = vpop.f32.mrb[0].mxu0
  %v2043 = vadd.f32 %v1962, %v2042
  %v2044 = vpop.f32.mrb[0].mxu0
  %2045 = vmatprep.mubr.f32.mxu0 0.0
  %2046 = vmatmul.mubr.f32.gmra.mrb[0].mxu0 %v1968
  %v2047 = vpop.f32.mrb[0].mxu0
  %v2048 = vadd.f32 %v1962, %v2047
  %v2049 = vpop.f32.mrb[0].mxu0
  %2050 = vmatprep.mubr.f32.mxu0 0.0
  %2051 = vmatmul.mubr.f32.gmra.mrb[0].mxu0 %v1971
  %v2052 = vpop.f32.mrb[0].mxu0
  %v2053 = vadd.f32 %v1962, %v2052
  %v2054 = vpop.f32.mrb[0].mxu0
  %2055 = vmatprep.mubr.f32.mxu0 0.0
  %2056 = vmatmul.mubr.f32.gmra.mrb[0].mxu0 %v1974
  %v2057 = vpop.f32.mrb[0].mxu0
  %v2058 = vadd.f32 %v1962, %v2057
  %v2059 = vpop.f32.mrb[0].mxu0
  %2060 = vdwg.mxu0
  %v2061 = vadd.f32 %v29, %v2043
  %v2062 = vadd.f32 %v30, %v2048
  %v2063 = vadd.f32 %v31, %v2053
  %v2064 = vadd.f32 %v32, %v2058
  %v2065 = vsel %vm148, %v2061, 0.0
  %v2066 = vsel %vm148, %v2062, 0.0
  %v2067 = vadd.f32 %v2065, %v2066
  %v2068 = vrot.slane %v2067, 4
  %v2069 = vadd.f32 %v2067, %v2068
  %v2070 = vrot.slane %v2069, 2
  %v2071 = vadd.f32 %v2069, %v2070
  %v2072 = vrot.slane %v2071, 1
  %v2073 = vadd.f32 %v2071, %v2072
  %v2074 = vrcp.pop 16.0
  %v2075 = vmul.f32 %v2073, %v2074
  %v2076 = vsub.f32 %v2061, %v2075
  %v2077 = vsub.f32 %v2062, %v2075
  %v2078 = vmul.f32 %v2076, %v2076
  %v2079 = vmul.f32 %v2077, %v2077
  %v2080 = vsel %vm148, %v2078, 0.0
  %v2081 = vsel %vm148, %v2079, 0.0
  %v2082 = vadd.f32 %v2080, %v2081
  %v2083 = vrot.slane %v2082, 4
  %v2084 = vadd.f32 %v2082, %v2083
  %v2085 = vrot.slane %v2084, 2
  %v2086 = vadd.f32 %v2084, %v2085
  %v2087 = vrot.slane %v2086, 1
  %v2088 = vadd.f32 %v2086, %v2087
  %v2089 = vmul.f32 %v2088, %v2074
  %v2090 = vadd.f32 %v2089, 1e-05
  %v2091 = vrsqrt.pop %v2090
  %v2092 = vmul.f32 %v2076, %v2091
  %v2093 = vmul.f32 %v2077, %v2091
  %v2094 = vmax.f32 %v2092, 0.0
  %v2095 = vmax.f32 %v2093, 0.0
  %v2096 = vsel %vm148, %v2063, 0.0
  %v2097 = vsel %vm148, %v2064, 0.0
  %v2098 = vadd.f32 %v2096, %v2097
  %v2099 = vrot.slane %v2098, 4
  %v2100 = vadd.f32 %v2098, %v2099
  %v2101 = vrot.slane %v2100, 2
  %v2102 = vadd.f32 %v2100, %v2101
  %v2103 = vrot.slane %v2102, 1
  %v2104 = vadd.f32 %v2102, %v2103
  %v2105 = vmul.f32 %v2104, %v2074
  %v2106 = vsub.f32 %v2063, %v2105
  %v2107 = vsub.f32 %v2064, %v2105
  %v2108 = vmul.f32 %v2106, %v2106
  %v2109 = vmul.f32 %v2107, %v2107
  %v2110 = vsel %vm148, %v2108, 0.0
  %v2111 = vsel %vm148, %v2109, 0.0
  %v2112 = vadd.f32 %v2110, %v2111
  %v2113 = vrot.slane %v2112, 4
  %v2114 = vadd.f32 %v2112, %v2113
  %v2115 = vrot.slane %v2114, 2
  %v2116 = vadd.f32 %v2114, %v2115
  %v2117 = vrot.slane %v2116, 1
  %v2118 = vadd.f32 %v2116, %v2117
  %v2119 = vmul.f32 %v2118, %v2074
  %v2120 = vadd.f32 %v2119, 1e-05
  %v2121 = vrsqrt.pop %v2120
  %v2122 = vmul.f32 %v2106, %v2121
  %v2123 = vmul.f32 %v2107, %v2121
  %v2124 = vmax.f32 %v2122, 0.0
  %v2125 = vmax.f32 %v2123, 0.0
  %2126 = vst.msk [vmem:[%s8] sm:$0xff] %vm148, %v2094
  %2127 = vst.msk [vmem:[%s8 + $0x8] sm:$0xff] %vm148, %v2095
  %2128 = vst.msk [vmem:[%s8 + $0x10] sm:$0xff] %vm148, %v2124
  %2129 = vst.msk [vmem:[%s8 + $0x18] sm:$0xff] %vm148, %v2125
  // Predicated region
  $region34: #{transformer_encoder_layer.1} parent=0 // pred_check
    _
  $region35: #{transformer_encoder_layer.1} parent=0 // pred_check_branch
    %2131 = sbr.rel (0) target = $region37
  $region36: #{transformer_encoder_layer.1} parent=0 // pred_region
    _
  $region37: #{transformer_encoder_layer.1} parent=0 // pred_fallthru
    _
  // Predicated region
  $region38: #{transformer_encoder_layer.1} parent=0 // pred_check
    _
  $region39: #{transformer_encoder_layer.1} parent=0 // pred_check_branch
    %2133 = sbr.rel (0) target = $region41
  $region40: #{transformer_encoder_layer.1} parent=0 // pred_region
    _
  $region41: #{transformer_encoder_layer.1} parent=0 // pred_fallthru
    _

</llo_original>
